<compile_context>
chip_gen: v7x
topology: tpu7x:2x2x1
jax: 0.10.0
libtpu: 0.0.40
codegen_flags: <defaults>
</compile_context>

<pallas_src>
import math

import jax
import jax.numpy as jnp
from jax.experimental import pallas as pl
from jax.experimental.pallas import tpu as pltpu

LANE = 128


def _round_up(x, m):
    return (x + m - 1) // m * m


def _pick_tile(dim, candidates=(1024, 512, 256, 128)):
    for c in candidates:
        if dim % c == 0:
            return c
    return dim  # padded dims are always multiples of 128, so this is unreachable


def _vmem_capacity_bytes():
    """Per-core VMEM capacity (128 MiB v5e/v6e, 64 MiB v7x); conservative default if unknown."""
    try:
        return int(pltpu.get_tpu_info().vmem_capacity_bytes)
    except Exception:
        return 64 * 2**20


def _choose_batch_tile(B, sub):
    """Pick (tm, padded_B): minimize padding, then prefer >=2 grid steps (megacore), then big tm."""
    best = None
    for c in (256, 128):
        B_p = _round_up(max(B, sub), c)
        steps = B_p // c
        key = (B_p, -min(steps, 2), -c)
        if best is None or key < best[0]:
            best = (key, c, B_p)
    return best[1], best[2]


def _apply_activation(y, activation):
    if activation is None:
        return y
    a = activation.lower()
    if a == "leakyrelu":
        return jnp.where(y >= 0, y, 0.2 * y)
    if a == "relu":
        return jnp.maximum(y, 0.0)
    if a == "gelu":
        return jax.nn.gelu(y)
    if a == "tanh":
        return jnp.tanh(y)
    if a == "sigmoid":
        return jax.nn.sigmoid(y)
    raise NotImplementedError(
        "`activation` must be one of [LeakyReLU, Tanh, Sigmoid, ReLU, GELU, None].")


def _is_transcendental(activation):
    return activation is not None and activation.lower() in ("gelu", "tanh", "sigmoid")


# ----------------------------------------------------------------------------
# Fused path: whole MLP in one pallas_call (weights resident in VMEM).
# ----------------------------------------------------------------------------
def _make_fused_kernel(n_layers, hidden_activation, final_activation):
    def kernel(*refs):
        x_ref = refs[0]
        o_ref = refs[1 + 2 * n_layers]
        scratch = refs[2 + 2 * n_layers:]
        h = x_ref[...]
        for i in range(n_layers):
            w_ref = refs[1 + 2 * i]
            b_ref = refs[2 + 2 * i]
            y = jnp.dot(h, w_ref[...], preferred_element_type=jnp.float32)
            y = y + b_ref[...]  # (1, N) f32 bias broadcasts over batch rows
            act = hidden_activation if i < n_layers - 1 else final_activation
            y = _apply_activation(y, act)
            if i < n_layers - 1:
                scratch[i][...] = y.astype(scratch[i].dtype)
                h = scratch[i][...]
            else:
                o_ref[...] = y.astype(o_ref.dtype)

    return kernel


def _resident_spec(shape, single_buffer):
    """Constant-index BlockSpec; with single_buffer=True, request 1 buffer (no double-buffering)."""
    index_map = lambda i: (0,) * len(shape)
    if single_buffer:
        try:
            return pl.BlockSpec(shape, index_map, pipeline_mode=pl.Buffered(1))
        except TypeError:
            # Older jax without pipeline_mode: fall back to default buffering.
            pass
    return pl.BlockSpec(shape, index_map)


def mlp_fused_pallas(x_p, params_p, hidden_activation, final_activation,
                     tm, out_dtype, compute_dtype, *, weight_buffers, vmem_limit):
    B_p, in_p = x_p.shape
    n_layers = len(params_p)
    dims_p = [in_p] + [w.shape[1] for w, _ in params_p]
    cdt_size = jnp.dtype(compute_dtype).itemsize
    out_size = jnp.dtype(out_dtype).itemsize
    single = weight_buffers == 1

    in_specs = [pl.BlockSpec((tm, in_p), lambda i: (i, 0))]
    args = [x_p]
    for w, b in params_p:
        # Constant index maps -> DMA'd once, resident across batch tiles.
        in_specs.append(_resident_spec(w.shape, single))
        in_specs.append(_resident_spec(b.shape, single))
        args.append(w)
        args.append(b)
    out_spec = pl.BlockSpec((tm, dims_p[-1]), lambda i: (i, 0))
    scratch_shapes = [pltpu.VMEM((tm, dims_p[i + 1]), compute_dtype)
                      for i in range(n_layers - 1)]

    weight_bytes = sum(w.size * cdt_size + b.size * 4 for w, b in params_p)
    flops = sum(2 * B_p * dims_p[i] * dims_p[i + 1] for i in range(n_layers))
    transcendentals = 0
    for i in range(n_layers):
        act = hidden_activation if i < n_layers - 1 else final_activation
        if _is_transcendental(act):
            transcendentals += B_p * dims_p[i + 1]
    bytes_accessed = x_p.size * cdt_size + weight_bytes + B_p * dims_p[-1] * out_size

    # TODO(synk): for very small batch grids, overlapping layer-k compute with layer-(k+1)
    # weight DMA (memory_space=pl.ANY + make_async_copy) would hide the initial weight load.
    return pl.pallas_call(
        _make_fused_kernel(n_layers, hidden_activation, final_activation),
        out_shape=jax.ShapeDtypeStruct((B_p, dims_p[-1]), out_dtype),
        grid_spec=pltpu.PrefetchScalarGridSpec(
            num_scalar_prefetch=0,
            grid=(B_p // tm,),
            in_specs=in_specs,
            out_specs=out_spec,
            scratch_shapes=scratch_shapes,
        ),
        compiler_params=pltpu.CompilerParams(
            dimension_semantics=("parallel",),
            vmem_limit_bytes=int(vmem_limit),
        ),
        cost_estimate=pl.CostEstimate(
            flops=flops, transcendentals=transcendentals,
            bytes_accessed=bytes_accessed),
    )(*args)


# ----------------------------------------------------------------------------
# Fallback path: per-layer (M, N, K)-tiled matmul with f32 accumulator.
# ----------------------------------------------------------------------------
def _make_tiled_linear_kernel(activation):
    def kernel(x_ref, w_ref, b_ref, o_ref, acc_ref):
        k = pl.program_id(2)

        @pl.when(k == 0)
        def _():
            acc_ref[...] = jnp.zeros_like(acc_ref)

        acc_ref[...] += jnp.dot(x_ref[...], w_ref[...],
                                preferred_element_type=jnp.float32)

        @pl.when(k == pl.num_programs(2) - 1)
        def _():
            y = acc_ref[...] + b_ref[...]          # bias only once, in finalize
            y = _apply_activation(y, activation)   # activation fused in finalize
            o_ref[...] = y.astype(o_ref.dtype)

    return kernel


def linear_block_tiled(x, w, b, activation, *, out_dtype, tm):
    M, K = x.shape
    K2, N = w.shape
    assert K2 == K
    tn = _pick_tile(N)
    tk = _pick_tile(K)
    grid = (M // tm, N // tn, K // tk)
    item = jnp.dtype(x.dtype).itemsize
    out_item = jnp.dtype(out_dtype).itemsize
    # Honest VMEM estimate: double-buffered x/w/bias/out blocks + f32 accumulator + headroom.
    est = (2 * tm * tk * item + 2 * tk * tn * item + 2 * tn * 4
           + 2 * tm * tn * out_item + tm * tn * 4 + (2 << 20))
    vmem_limit = int(min(_vmem_capacity_bytes(), max(est + (8 << 20), 32 << 20)))
    return pl.pallas_call(
        _make_tiled_linear_kernel(activation),
        out_shape=jax.ShapeDtypeStruct((M, N), out_dtype),
        grid_spec=pltpu.PrefetchScalarGridSpec(
            num_scalar_prefetch=0,
            grid=grid,
            in_specs=[
                pl.BlockSpec((tm, tk), lambda i, j, k: (i, k)),
                pl.BlockSpec((tk, tn), lambda i, j, k: (k, j)),
                pl.BlockSpec((1, tn), lambda i, j, k: (0, j)),
            ],
            out_specs=pl.BlockSpec((tm, tn), lambda i, j, k: (i, j)),
            scratch_shapes=[pltpu.VMEM((tm, tn), jnp.float32)],
        ),
        compiler_params=pltpu.CompilerParams(
            dimension_semantics=("parallel", "parallel", "arbitrary"),
            vmem_limit_bytes=vmem_limit,
        ),
        cost_estimate=pl.CostEstimate(
            flops=2 * M * N * K,
            transcendentals=(M * N if _is_transcendental(activation) else 0),
            bytes_accessed=(M * K + K * N) * item + N * 4 + M * N * out_item),
    )(x, w, b)


# ----------------------------------------------------------------------------
# Parameters & forward pass (matches MLP.forward with dropout=0.0, use_batch_norm=False).
# ----------------------------------------------------------------------------
def init_mlp_params(key, in_dim, out_dim, hidden_dims):
    """nn.Linear default init (U[-1/sqrt(fan_in), 1/sqrt(fan_in)]); weights stored (in, out)."""
    dims = [in_dim] + list(hidden_dims) + [out_dim]
    params = []
    for i in range(len(dims) - 1):
        key, kw, kb = jax.random.split(key, 3)
        fan_in, fan_out = dims[i], dims[i + 1]
        bound = 1.0 / math.sqrt(fan_in)
        w = jax.random.uniform(kw, (fan_in, fan_out), jnp.float32, -bound, bound)
        b = jax.random.uniform(kb, (fan_out,), jnp.float32, -bound, bound)
        params.append((w, b))
    return params


def prepare_mlp_params(params, compute_dtype=jnp.bfloat16):
    """Pad feature dims to x128 and cast weights to the compute dtype ONCE (hoisted out of the
    per-call forward path; doing this per forward dominates small-batch inference HBM traffic)."""
    dims = [params[0][0].shape[0]] + [w.shape[1] for w, _ in params]
    dims_p = [_round_up(d, LANE) for d in dims]
    params_p = []
    for i, (w, b) in enumerate(params):
        w_p = jnp.zeros((dims_p[i], dims_p[i + 1]), compute_dtype)
        w_p = w_p.at[:dims[i], :dims[i + 1]].set(w.astype(compute_dtype))
        b_p = jnp.zeros((1, dims_p[i + 1]), jnp.float32)
        b_p = b_p.at[0, :dims[i + 1]].set(b.astype(jnp.float32))
        params_p.append((w_p, b_p))
    return {"params_p": params_p, "dims": dims, "dims_p": dims_p,
            "compute_dtype": compute_dtype}


def mlp_forward(prepared, x, hidden_activation="LeakyReLU", final_activation=None,
                flatten=True, out_dtype=jnp.float32, force_path=None):
    """Forward pass. `prepared` is either prepare_mlp_params(...) output or a raw [(w, b), ...]
    list (then padding/casting happens per call). Precision contract: bf16 operands, f32 MXU
    accumulation, hidden activations round-tripped through bf16 (not a pure-f32 PyTorch match)."""
    if isinstance(prepared, (list, tuple)):
        prepared = prepare_mlp_params(prepared)
    params_p = prepared["params_p"]
    dims, dims_p = prepared["dims"], prepared["dims_p"]
    compute_dtype = prepared["compute_dtype"]
    in_dim, out_dim = dims[0], dims[-1]
    n_layers = len(params_p)

    if x.ndim == 1:
        x = x[None, :]
    if flatten:
        x = x.reshape(x.shape[0], -1)
        lead_shape = None
    else:
        lead_shape = x.shape[:-1]
        x = x.reshape(-1, x.shape[-1])
    B = x.shape[0]
    assert x.shape[1] == in_dim, f"expected feature dim {in_dim}, got {x.shape[1]}"

    # --- batch tiling: minimize padding waste, prefer >=2 grid steps for megacore. ---
    sub = 16 if jnp.dtype(compute_dtype) == jnp.dtype(jnp.bfloat16) else 8
    tm, B_p = _choose_batch_tile(B, sub)

    x_p = jnp.zeros((B_p, dims_p[0]), compute_dtype).at[:B, :in_dim].set(
        x.astype(compute_dtype))

    # --- generation-aware VMEM budgeting (includes buffering factors + headroom). ---
    capacity = _vmem_capacity_bytes()            # 128 MiB v5e/v6e, 64 MiB v7x
    budget = capacity - (16 << 20)               # compiler internal scratch / sems headroom
    cdt_size = jnp.dtype(compute_dtype).itemsize
    out_size = jnp.dtype(out_dtype).itemsize
    weight_bytes = sum(w.size * cdt_size + b.size * 4 for w, b in params_p)

    def fused_estimate(wb):
        return (wb * weight_bytes                              # resident weights (wb buffers)
                + 2 * tm * dims_p[0] * cdt_size                # double-buffered x tile
                + 2 * tm * dims_p[-1] * out_size               # double-buffered out tile
                + sum(tm * d * cdt_size for d in dims_p[1:-1]) # hidden-activation scratch
                + (2 << 20))                                   # misc

    use_fused = (force_path == "fused"
                 or (force_path is None and fused_estimate(1) <= budget))

    y_p = None
    if use_fused:
        # Prefer single-buffered resident weights; fall back to default buffering, then tiled.
        for wb in (1, 2):
            est = fused_estimate(wb)
            if force_path != "fused" and est > budget:
                continue
            vmem_limit = min(capacity, max(est + (8 << 20), 32 << 20))
            try:
                y_p = mlp_fused_pallas(x_p, params_p, hidden_activation, final_activation,
                                       tm, out_dtype, compute_dtype,
                                       weight_buffers=wb, vmem_limit=vmem_limit)
                break
            except Exception:
                y_p = None

    if y_p is None:
        # Per-layer (M, N, K)-tiled fallback (larger tiles: tm up to 512, tn/tk up to 1024).
        tm_tiled = _pick_tile(B_p, (512, 256, 128))
        h = x_p
        for i, (w_p, b_p) in enumerate(params_p):
            is_last = i == n_layers - 1
            act = hidden_activation if not is_last else final_activation
            h = linear_block_tiled(h, w_p, b_p, act,
                                   out_dtype=out_dtype if is_last else compute_dtype,
                                   tm=tm_tiled)
        y_p = h

    y = y_p[:B, :out_dim]

    if not flatten:
        # Mirrors the PyTorch module's `y.reshape(*shape, 1)`, which is only valid for out_dim==1.
        assert out_dim == 1, "flatten=False reshape to (*lead_shape, 1) requires out_dim == 1"
        y = y.reshape(*lead_shape, 1)
    return y


if __name__ == "__main__":
    key = jax.random.PRNGKey(0)
    kx, kp, kx2, kp2 = jax.random.split(key, 4)

    def ref_forward(params, x, hidden_activation="LeakyReLU", final_activation=None,
                    compute_dtype=jnp.bfloat16):
        # Pure-JAX reference with the same dtype flow (bf16 operands, f32 accumulate).
        h = x.astype(compute_dtype)
        n = len(params)
        for i, (w, b) in enumerate(params):
            z = jnp.dot(h, w.astype(compute_dtype),
                        preferred_element_type=jnp.float32) + b
            act = hidden_activation if i < n - 1 else final_activation
            z = _apply_activation(z, act)
            h = z.astype(compute_dtype) if i < n - 1 else z
        return h

    # ---- Example 1: fused single-kernel path (scaled-down stand-in for [2048, 2048]),
    # with weights prepared (padded/cast) once outside the forward pass. ----
    B, in_dim, out_dim = 2, 16, 8
    hidden_dims = [32, 32]
    x = jax.random.normal(kx, (B, in_dim), dtype=jnp.float32)
    params = init_mlp_params(kp, in_dim, out_dim, hidden_dims)
    prepared = prepare_mlp_params(params)

    y = mlp_forward(prepared, x, hidden_activation="LeakyReLU", final_activation=None)
    jax.block_until_ready(y)
    assert y.shape == (B, out_dim)

    ref_bf16 = ref_forward(params, x)
    assert jnp.allclose(y, ref_bf16, atol=1e-2, rtol=1e-2)

    ref_f32 = x
    for i, (w, b) in enumerate(params):
        ref_f32 = ref_f32 @ w + b
        if i < len(params) - 1:
            ref_f32 = jnp.where(ref_f32 >= 0, ref_f32, 0.2 * ref_f32)
    assert jnp.allclose(y, ref_f32, atol=0.1, rtol=0.1)

    # ---- Example 2: force the per-layer (M, N, K)-tiled fallback (multi-tile K/N grid),
    # passing raw params (prepared on the fly). ----
    B2, in2, out2 = 2, 300, 8
    hidden2 = [384, 256]
    x2 = jax.random.normal(kx2, (B2, in2), dtype=jnp.float32)
    params2 = init_mlp_params(kp2, in2, out2, hidden2)
    y2 = mlp_forward(params2, x2, hidden_activation="LeakyReLU",
                     final_activation="Sigmoid", force_path="tiled")
    jax.block_until_ready(y2)
    assert y2.shape == (B2, out2)
    ref2 = ref_forward(params2, x2, final_activation="Sigmoid")
    assert jnp.allclose(y2, ref2, atol=1e-2, rtol=1e-2)

    # TODO(synk): dropout (p > 0) and BatchNorm1d are not implemented (module defaults are
    # dropout=0.0, use_batch_norm=False, so the forward pass here is complete).
    # TODO(synk): optional fp8 weight path (per-channel scale in the epilogue) for v7x.
    print("KERNEL_OK")
</pallas_src>

<mosaic_0001>
module attributes {stable_mosaic.version = 11 : i64} {
  func.func @kernel(%arg0: i32, %arg1: memref<128x128xbf16, #tpu.memory_space<vmem>>, %arg2: memref<128x128xbf16, #tpu.memory_space<vmem>>, %arg3: memref<1x128xf32, #tpu.memory_space<vmem>>, %arg4: memref<128x128xbf16, #tpu.memory_space<vmem>>, %arg5: memref<1x128xf32, #tpu.memory_space<vmem>>, %arg6: memref<128x128xbf16, #tpu.memory_space<vmem>>, %arg7: memref<1x128xf32, #tpu.memory_space<vmem>>, %arg8: memref<128x128xf32, #tpu.memory_space<vmem>>, %arg9: memref<128x128xbf16, #tpu.memory_space<vmem>>, %arg10: memref<128x128xbf16, #tpu.memory_space<vmem>>) attributes {dimension_semantics = [#tpu.dimension_semantics<parallel>], iteration_bounds = array<i64: 1>, scalar_prefetch = 0 : i64, scratch_operands = 2 : i64, tpu.core_type = #tpu.core_type<tc>, window_params = [{transform_indices = @transform_0, window_bounds = array<i64: 128, 128>}, {pipeline_mode = #tpu.pipeline_mode<synchronous>, transform_indices = @transform_1, window_bounds = array<i64: 128, 128>}, {pipeline_mode = #tpu.pipeline_mode<synchronous>, transform_indices = @transform_2, window_bounds = array<i64: 1, 128>}, {pipeline_mode = #tpu.pipeline_mode<synchronous>, transform_indices = @transform_3, window_bounds = array<i64: 128, 128>}, {pipeline_mode = #tpu.pipeline_mode<synchronous>, transform_indices = @transform_4, window_bounds = array<i64: 1, 128>}, {pipeline_mode = #tpu.pipeline_mode<synchronous>, transform_indices = @transform_5, window_bounds = array<i64: 128, 128>}, {pipeline_mode = #tpu.pipeline_mode<synchronous>, transform_indices = @transform_6, window_bounds = array<i64: 1, 128>}, {transform_indices = @transform_7, window_bounds = array<i64: 128, 128>}]} {
    %c0 = arith.constant 0 : index
    %c0_0 = arith.constant 0 : index
    %0 = vector.load %arg1[%c0, %c0_0] : memref<128x128xbf16, #tpu.memory_space<vmem>>, vector<128x128xbf16>
    %c0_1 = arith.constant 0 : index
    %c0_2 = arith.constant 0 : index
    %1 = vector.load %arg2[%c0_1, %c0_2] : memref<128x128xbf16, #tpu.memory_space<vmem>>, vector<128x128xbf16>
    %cst = arith.constant dense<0.000000e+00> : vector<128x128xf32>
    %2 = tpu.matmul %0, %1, %cst {dimension_numbers = #tpu.dot_dimension_numbers<[1], [0], [0], [1], [0, 0, 1, 1], [], []>} : vector<128x128xbf16>, vector<128x128xbf16>, vector<128x128xf32> -> vector<128x128xf32>
    %c0_3 = arith.constant 0 : index
    %c0_4 = arith.constant 0 : index
    %3 = vector.load %arg3[%c0_3, %c0_4] : memref<1x128xf32, #tpu.memory_space<vmem>>, vector<1x128xf32>
    %4 = vector.broadcast %3 : vector<1x128xf32> to vector<128x128xf32>
    %5 = arith.addf %2, %4 : vector<128x128xf32>
    %cst_5 = arith.constant 0.000000e+00 : f32
    %6 = vector.broadcast %cst_5 : f32 to vector<128x128xf32>
    %7 = arith.cmpf oge, %5, %6 : vector<128x128xf32>
    %cst_6 = arith.constant 2.000000e-01 : f32
    %8 = vector.broadcast %cst_6 : f32 to vector<128x128xf32>
    %9 = arith.mulf %8, %5 : vector<128x128xf32>
    %10 = arith.select %7, %5, %9 : vector<128x128xi1>, vector<128x128xf32>
    %11 = arith.truncf %10 : vector<128x128xf32> to vector<128x128xbf16>
    %c0_7 = arith.constant 0 : index
    %c0_8 = arith.constant 0 : index
    %12 = vector.load %arg9[%c0_7, %c0_8] : memref<128x128xbf16, #tpu.memory_space<vmem>>, vector<128x128xbf16>
    tpu.vector_store %arg9[%c0_7, %c0_8], %11 {strides = array<i32>} : memref<128x128xbf16, #tpu.memory_space<vmem>>, vector<128x128xbf16>,
    %c0_9 = arith.constant 0 : index
    %c0_10 = arith.constant 0 : index
    %13 = vector.load %arg9[%c0_9, %c0_10] : memref<128x128xbf16, #tpu.memory_space<vmem>>, vector<128x128xbf16>
    %c0_11 = arith.constant 0 : index
    %c0_12 = arith.constant 0 : index
    %14 = vector.load %arg4[%c0_11, %c0_12] : memref<128x128xbf16, #tpu.memory_space<vmem>>, vector<128x128xbf16>
    %cst_13 = arith.constant dense<0.000000e+00> : vector<128x128xf32>
    %15 = tpu.matmul %13, %14, %cst_13 {dimension_numbers = #tpu.dot_dimension_numbers<[1], [0], [0], [1], [0, 0, 1, 1], [], []>} : vector<128x128xbf16>, vector<128x128xbf16>, vector<128x128xf32> -> vector<128x128xf32>
    %c0_14 = arith.constant 0 : index
    %c0_15 = arith.constant 0 : index
    %16 = vector.load %arg5[%c0_14, %c0_15] : memref<1x128xf32, #tpu.memory_space<vmem>>, vector<1x128xf32>
    %17 = vector.broadcast %16 : vector<1x128xf32> to vector<128x128xf32>
    %18 = arith.addf %15, %17 : vector<128x128xf32>
    %cst_16 = arith.constant 0.000000e+00 : f32
    %19 = vector.broadcast %cst_16 : f32 to vector<128x128xf32>
    %20 = arith.cmpf oge, %18, %19 : vector<128x128xf32>
    %cst_17 = arith.constant 2.000000e-01 : f32
    %21 = vector.broadcast %cst_17 : f32 to vector<128x128xf32>
    %22 = arith.mulf %21, %18 : vector<128x128xf32>
    %23 = arith.select %20, %18, %22 : vector<128x128xi1>, vector<128x128xf32>
    %24 = arith.truncf %23 : vector<128x128xf32> to vector<128x128xbf16>
    %c0_18 = arith.constant 0 : index
    %c0_19 = arith.constant 0 : index
    %25 = vector.load %arg10[%c0_18, %c0_19] : memref<128x128xbf16, #tpu.memory_space<vmem>>, vector<128x128xbf16>
    tpu.vector_store %arg10[%c0_18, %c0_19], %24 {strides = array<i32>} : memref<128x128xbf16, #tpu.memory_space<vmem>>, vector<128x128xbf16>,
    %c0_20 = arith.constant 0 : index
    %c0_21 = arith.constant 0 : index
    %26 = vector.load %arg10[%c0_20, %c0_21] : memref<128x128xbf16, #tpu.memory_space<vmem>>, vector<128x128xbf16>
    %c0_22 = arith.constant 0 : index
    %c0_23 = arith.constant 0 : index
    %27 = vector.load %arg6[%c0_22, %c0_23] : memref<128x128xbf16, #tpu.memory_space<vmem>>, vector<128x128xbf16>
    %cst_24 = arith.constant dense<0.000000e+00> : vector<128x128xf32>
    %28 = tpu.matmul %26, %27, %cst_24 {dimension_numbers = #tpu.dot_dimension_numbers<[1], [0], [0], [1], [0, 0, 1, 1], [], []>} : vector<128x128xbf16>, vector<128x128xbf16>, vector<128x128xf32> -> vector<128x128xf32>
    %c0_25 = arith.constant 0 : index
    %c0_26 = arith.constant 0 : index
    %29 = vector.load %arg7[%c0_25, %c0_26] : memref<1x128xf32, #tpu.memory_space<vmem>>, vector<1x128xf32>
    %30 = vector.broadcast %29 : vector<1x128xf32> to vector<128x128xf32>
    %31 = arith.addf %28, %30 : vector<128x128xf32>
    %c0_27 = arith.constant 0 : index
    %c0_28 = arith.constant 0 : index
    %32 = vector.load %arg8[%c0_27, %c0_28] : memref<128x128xf32, #tpu.memory_space<vmem>>, vector<128x128xf32>
    tpu.vector_store %arg8[%c0_27, %c0_28], %31 {strides = array<i32>} : memref<128x128xf32, #tpu.memory_space<vmem>>, vector<128x128xf32>,
    return
  }
  func.func @transform_0(%arg0: i32) -> (i32, i32) {
    %c0_i32 = arith.constant 0 : i32
    %c0_i32_0 = arith.constant 0 : i32
    return %arg0, %c0_i32 : i32, i32
  }
  func.func @transform_1(%arg0: i32) -> (i32, i32) {
    %c0_i32 = arith.constant 0 : i32
    %c0_i32_0 = arith.constant 0 : i32
    %c0_i32_1 = arith.constant 0 : i32
    return %c0_i32, %c0_i32_0 : i32, i32
  }
  func.func @transform_2(%arg0: i32) -> (i32, i32) {
    %c0_i32 = arith.constant 0 : i32
    %c0_i32_0 = arith.constant 0 : i32
    %c0_i32_1 = arith.constant 0 : i32
    return %c0_i32, %c0_i32_0 : i32, i32
  }
  func.func @transform_3(%arg0: i32) -> (i32, i32) {
    %c0_i32 = arith.constant 0 : i32
    %c0_i32_0 = arith.constant 0 : i32
    %c0_i32_1 = arith.constant 0 : i32
    return %c0_i32, %c0_i32_0 : i32, i32
  }
  func.func @transform_4(%arg0: i32) -> (i32, i32) {
    %c0_i32 = arith.constant 0 : i32
    %c0_i32_0 = arith.constant 0 : i32
    %c0_i32_1 = arith.constant 0 : i32
    return %c0_i32, %c0_i32_0 : i32, i32
  }
  func.func @transform_5(%arg0: i32) -> (i32, i32) {
    %c0_i32 = arith.constant 0 : i32
    %c0_i32_0 = arith.constant 0 : i32
    %c0_i32_1 = arith.constant 0 : i32
    return %c0_i32, %c0_i32_0 : i32, i32
  }
  func.func @transform_6(%arg0: i32) -> (i32, i32) {
    %c0_i32 = arith.constant 0 : i32
    %c0_i32_0 = arith.constant 0 : i32
    %c0_i32_1 = arith.constant 0 : i32
    return %c0_i32, %c0_i32_0 : i32, i32
  }
  func.func @transform_7(%arg0: i32) -> (i32, i32) {
    %c0_i32 = arith.constant 0 : i32
    %c0_i32_0 = arith.constant 0 : i32
    return %arg0, %c0_i32 : i32, i32
  }
}

module attributes {stable_mosaic.version = 11 : i64} {
  func.func @kernel(%arg0: i32, %arg1: memref<128x128xbf16, #tpu.memory_space<vmem>>, %arg2: memref<128x128xbf16, #tpu.memory_space<vmem>>, %arg3: memref<1x128xf32, #tpu.memory_space<vmem>>, %arg4: memref<128x128xbf16, #tpu.memory_space<vmem>>, %arg5: memref<1x128xf32, #tpu.memory_space<vmem>>, %arg6: memref<128x128xbf16, #tpu.memory_space<vmem>>, %arg7: memref<1x128xf32, #tpu.memory_space<vmem>>, %arg8: memref<128x128xf32, #tpu.memory_space<vmem>>, %arg9: memref<128x128xbf16, #tpu.memory_space<vmem>>, %arg10: memref<128x128xbf16, #tpu.memory_space<vmem>>) attributes {dimension_semantics = [#tpu.dimension_semantics<parallel>], iteration_bounds = array<i64: 1>, scalar_prefetch = 0 : i64, scratch_operands = 2 : i64, tpu.core_type = #tpu.core_type<tc>, window_params = [{transform_indices = @transform_0, window_bounds = array<i64: 128, 128>}, {pipeline_mode = #tpu.pipeline_mode<synchronous>, transform_indices = @transform_1, window_bounds = array<i64: 128, 128>}, {pipeline_mode = #tpu.pipeline_mode<synchronous>, transform_indices = @transform_2, window_bounds = array<i64: 1, 128>}, {pipeline_mode = #tpu.pipeline_mode<synchronous>, transform_indices = @transform_3, window_bounds = array<i64: 128, 128>}, {pipeline_mode = #tpu.pipeline_mode<synchronous>, transform_indices = @transform_4, window_bounds = array<i64: 1, 128>}, {pipeline_mode = #tpu.pipeline_mode<synchronous>, transform_indices = @transform_5, window_bounds = array<i64: 128, 128>}, {pipeline_mode = #tpu.pipeline_mode<synchronous>, transform_indices = @transform_6, window_bounds = array<i64: 1, 128>}, {transform_indices = @transform_7, window_bounds = array<i64: 128, 128>}]} {
    %c0 = arith.constant 0 : index
    %c0_0 = arith.constant 0 : index
    %0 = vector.load %arg1[%c0, %c0_0] : memref<128x128xbf16, #tpu.memory_space<vmem>>, vector<128x128xbf16>
    %c0_1 = arith.constant 0 : index
    %c0_2 = arith.constant 0 : index
    %1 = vector.load %arg2[%c0_1, %c0_2] : memref<128x128xbf16, #tpu.memory_space<vmem>>, vector<128x128xbf16>
    %cst = arith.constant dense<0.000000e+00> : vector<128x128xf32>
    %2 = tpu.matmul %0, %1, %cst {dimension_numbers = #tpu.dot_dimension_numbers<[1], [0], [0], [1], [0, 0, 1, 1], [], []>} : vector<128x128xbf16>, vector<128x128xbf16>, vector<128x128xf32> -> vector<128x128xf32>
    %c0_3 = arith.constant 0 : index
    %c0_4 = arith.constant 0 : index
    %3 = vector.load %arg3[%c0_3, %c0_4] : memref<1x128xf32, #tpu.memory_space<vmem>>, vector<1x128xf32>
    %4 = vector.broadcast %3 : vector<1x128xf32> to vector<128x128xf32>
    %5 = arith.addf %2, %4 : vector<128x128xf32>
    %cst_5 = arith.constant 0.000000e+00 : f32
    %6 = vector.broadcast %cst_5 : f32 to vector<128x128xf32>
    %7 = arith.cmpf oge, %5, %6 : vector<128x128xf32>
    %cst_6 = arith.constant 2.000000e-01 : f32
    %8 = vector.broadcast %cst_6 : f32 to vector<128x128xf32>
    %9 = arith.mulf %8, %5 : vector<128x128xf32>
    %10 = arith.select %7, %5, %9 : vector<128x128xi1>, vector<128x128xf32>
    %11 = arith.truncf %10 : vector<128x128xf32> to vector<128x128xbf16>
    %c0_7 = arith.constant 0 : index
    %c0_8 = arith.constant 0 : index
    %12 = vector.load %arg9[%c0_7, %c0_8] : memref<128x128xbf16, #tpu.memory_space<vmem>>, vector<128x128xbf16>
    tpu.vector_store %arg9[%c0_7, %c0_8], %11 {strides = array<i32>} : memref<128x128xbf16, #tpu.memory_space<vmem>>, vector<128x128xbf16>,
    %c0_9 = arith.constant 0 : index
    %c0_10 = arith.constant 0 : index
    %13 = vector.load %arg9[%c0_9, %c0_10] : memref<128x128xbf16, #tpu.memory_space<vmem>>, vector<128x128xbf16>
    %c0_11 = arith.constant 0 : index
    %c0_12 = arith.constant 0 : index
    %14 = vector.load %arg4[%c0_11, %c0_12] : memref<128x128xbf16, #tpu.memory_space<vmem>>, vector<128x128xbf16>
    %cst_13 = arith.constant dense<0.000000e+00> : vector<128x128xf32>
    %15 = tpu.matmul %13, %14, %cst_13 {dimension_numbers = #tpu.dot_dimension_numbers<[1], [0], [0], [1], [0, 0, 1, 1], [], []>} : vector<128x128xbf16>, vector<128x128xbf16>, vector<128x128xf32> -> vector<128x128xf32>
    %c0_14 = arith.constant 0 : index
    %c0_15 = arith.constant 0 : index
    %16 = vector.load %arg5[%c0_14, %c0_15] : memref<1x128xf32, #tpu.memory_space<vmem>>, vector<1x128xf32>
    %17 = vector.broadcast %16 : vector<1x128xf32> to vector<128x128xf32>
    %18 = arith.addf %15, %17 : vector<128x128xf32>
    %cst_16 = arith.constant 0.000000e+00 : f32
    %19 = vector.broadcast %cst_16 : f32 to vector<128x128xf32>
    %20 = arith.cmpf oge, %18, %19 : vector<128x128xf32>
    %cst_17 = arith.constant 2.000000e-01 : f32
    %21 = vector.broadcast %cst_17 : f32 to vector<128x128xf32>
    %22 = arith.mulf %21, %18 : vector<128x128xf32>
    %23 = arith.select %20, %18, %22 : vector<128x128xi1>, vector<128x128xf32>
    %24 = arith.truncf %23 : vector<128x128xf32> to vector<128x128xbf16>
    %c0_18 = arith.constant 0 : index
    %c0_19 = arith.constant 0 : index
    %25 = vector.load %arg10[%c0_18, %c0_19] : memref<128x128xbf16, #tpu.memory_space<vmem>>, vector<128x128xbf16>
    tpu.vector_store %arg10[%c0_18, %c0_19], %24 {strides = array<i32>} : memref<128x128xbf16, #tpu.memory_space<vmem>>, vector<128x128xbf16>,
    %c0_20 = arith.constant 0 : index
    %c0_21 = arith.constant 0 : index
    %26 = vector.load %arg10[%c0_20, %c0_21] : memref<128x128xbf16, #tpu.memory_space<vmem>>, vector<128x128xbf16>
    %c0_22 = arith.constant 0 : index
    %c0_23 = arith.constant 0 : index
    %27 = vector.load %arg6[%c0_22, %c0_23] : memref<128x128xbf16, #tpu.memory_space<vmem>>, vector<128x128xbf16>
    %cst_24 = arith.constant dense<0.000000e+00> : vector<128x128xf32>
    %28 = tpu.matmul %26, %27, %cst_24 {dimension_numbers = #tpu.dot_dimension_numbers<[1], [0], [0], [1], [0, 0, 1, 1], [], []>} : vector<128x128xbf16>, vector<128x128xbf16>, vector<128x128xf32> -> vector<128x128xf32>
    %c0_25 = arith.constant 0 : index
    %c0_26 = arith.constant 0 : index
    %29 = vector.load %arg7[%c0_25, %c0_26] : memref<1x128xf32, #tpu.memory_space<vmem>>, vector<1x128xf32>
    %30 = vector.broadcast %29 : vector<1x128xf32> to vector<128x128xf32>
    %31 = arith.addf %28, %30 : vector<128x128xf32>
    %c0_27 = arith.constant 0 : index
    %c0_28 = arith.constant 0 : index
    %32 = vector.load %arg8[%c0_27, %c0_28] : memref<128x128xf32, #tpu.memory_space<vmem>>, vector<128x128xf32>
    tpu.vector_store %arg8[%c0_27, %c0_28], %31 {strides = array<i32>} : memref<128x128xf32, #tpu.memory_space<vmem>>, vector<128x128xf32>,
    return
  }
  func.func @transform_0(%arg0: i32) -> (i32, i32) {
    %c0_i32 = arith.constant 0 : i32
    %c0_i32_0 = arith.constant 0 : i32
    return %arg0, %c0_i32 : i32, i32
  }
  func.func @transform_1(%arg0: i32) -> (i32, i32) {
    %c0_i32 = arith.constant 0 : i32
    %c0_i32_0 = arith.constant 0 : i32
    %c0_i32_1 = arith.constant 0 : i32
    return %c0_i32, %c0_i32_0 : i32, i32
  }
  func.func @transform_2(%arg0: i32) -> (i32, i32) {
    %c0_i32 = arith.constant 0 : i32
    %c0_i32_0 = arith.constant 0 : i32
    %c0_i32_1 = arith.constant 0 : i32
    return %c0_i32, %c0_i32_0 : i32, i32
  }
  func.func @transform_3(%arg0: i32) -> (i32, i32) {
    %c0_i32 = arith.constant 0 : i32
    %c0_i32_0 = arith.constant 0 : i32
    %c0_i32_1 = arith.constant 0 : i32
    return %c0_i32, %c0_i32_0 : i32, i32
  }
  func.func @transform_4(%arg0: i32) -> (i32, i32) {
    %c0_i32 = arith.constant 0 : i32
    %c0_i32_0 = arith.constant 0 : i32
    %c0_i32_1 = arith.constant 0 : i32
    return %c0_i32, %c0_i32_0 : i32, i32
  }
  func.func @transform_5(%arg0: i32) -> (i32, i32) {
    %c0_i32 = arith.constant 0 : i32
    %c0_i32_0 = arith.constant 0 : i32
    %c0_i32_1 = arith.constant 0 : i32
    return %c0_i32, %c0_i32_0 : i32, i32
  }
  func.func @transform_6(%arg0: i32) -> (i32, i32) {
    %c0_i32 = arith.constant 0 : i32
    %c0_i32_0 = arith.constant 0 : i32
    %c0_i32_1 = arith.constant 0 : i32
    return %c0_i32, %c0_i32_0 : i32, i32
  }
  func.func @transform_7(%arg0: i32) -> (i32, i32) {
    %c0_i32 = arith.constant 0 : i32
    %c0_i32_0 = arith.constant 0 : i32
    return %arg0, %c0_i32 : i32, i32
  }
}

module attributes {stable_mosaic.version = 11 : i64} {
  func.func @kernel(%arg0: i32, %arg1: i32, %arg2: i32, %arg3: memref<128x128xbf16, #tpu.memory_space<vmem>>, %arg4: memref<128x128xbf16, #tpu.memory_space<vmem>>, %arg5: memref<1x128xf32, #tpu.memory_space<vmem>>, %arg6: memref<128x128xbf16, #tpu.memory_space<vmem>>, %arg7: memref<128x128xf32, #tpu.memory_space<vmem>>) attributes {dimension_semantics = [#tpu.dimension_semantics<parallel>, #tpu.dimension_semantics<parallel>, #tpu.dimension_semantics<arbitrary>], iteration_bounds = array<i64: 1, 1, 1>, scalar_prefetch = 0 : i64, scratch_operands = 1 : i64, tpu.core_type = #tpu.core_type<tc>, window_params = [{transform_indices = @transform_0, window_bounds = array<i64: 128, 128>}, {transform_indices = @transform_1, window_bounds = array<i64: 128, 128>}, {transform_indices = @transform_2, window_bounds = array<i64: 1, 128>}, {transform_indices = @transform_3, window_bounds = array<i64: 128, 128>}]} {
    %c0_i32 = arith.constant 0 : i32
    %0 = arith.cmpi eq, %arg2, %c0_i32 : i32
    %1 = arith.extui %0 : i1 to i32
    %c0_i32_0 = arith.constant 0 : i32
    %2 = arith.cmpi ne, %1, %c0_i32_0 : i32
    scf.if %2 {
      %cst_10 = arith.constant 0.000000e+00 : f32
      %12 = vector.broadcast %cst_10 : f32 to vector<128x128xf32>
      %c0_11 = arith.constant 0 : index
      %c0_12 = arith.constant 0 : index
      %13 = vector.load %arg7[%c0_11, %c0_12] : memref<128x128xf32, #tpu.memory_space<vmem>>, vector<128x128xf32>
      tpu.vector_store %arg7[%c0_11, %c0_12], %12 {strides = array<i32>} : memref<128x128xf32, #tpu.memory_space<vmem>>, vector<128x128xf32>,
    } else {
    }
    %c0 = arith.constant 0 : index
    %c0_1 = arith.constant 0 : index
    %3 = vector.load %arg7[%c0, %c0_1] : memref<128x128xf32, #tpu.memory_space<vmem>>, vector<128x128xf32>
    %c0_2 = arith.constant 0 : index
    %c0_3 = arith.constant 0 : index
    %4 = vector.load %arg3[%c0_2, %c0_3] : memref<128x128xbf16, #tpu.memory_space<vmem>>, vector<128x128xbf16>
    %c0_4 = arith.constant 0 : index
    %c0_5 = arith.constant 0 : index
    %5 = vector.load %arg4[%c0_4, %c0_5] : memref<128x128xbf16, #tpu.memory_space<vmem>>, vector<128x128xbf16>
    %cst = arith.constant dense<0.000000e+00> : vector<128x128xf32>
    %6 = tpu.matmul %4, %5, %cst {dimension_numbers = #tpu.dot_dimension_numbers<[1], [0], [0], [1], [0, 0, 1, 1], [], []>} : vector<128x128xbf16>, vector<128x128xbf16>, vector<128x128xf32> -> vector<128x128xf32>
    %7 = arith.addf %3, %6 : vector<128x128xf32>
    %c0_6 = arith.constant 0 : index
    %c0_7 = arith.constant 0 : index
    %8 = vector.load %arg7[%c0_6, %c0_7] : memref<128x128xf32, #tpu.memory_space<vmem>>, vector<128x128xf32>
    tpu.vector_store %arg7[%c0_6, %c0_7], %7 {strides = array<i32>} : memref<128x128xf32, #tpu.memory_space<vmem>>, vector<128x128xf32>,
    %c0_i32_8 = arith.constant 0 : i32
    %9 = arith.cmpi eq, %arg2, %c0_i32_8 : i32
    %10 = arith.extui %9 : i1 to i32
    %c0_i32_9 = arith.constant 0 : i32
    %11 = arith.cmpi ne, %10, %c0_i32_9 : i32
    scf.if %11 {
      %c0_10 = arith.constant 0 : index
      %c0_11 = arith.constant 0 : index
      %12 = vector.load %arg7[%c0_10, %c0_11] : memref<128x128xf32, #tpu.memory_space<vmem>>, vector<128x128xf32>
      %c0_12 = arith.constant 0 : index
      %c0_13 = arith.constant 0 : index
      %13 = vector.load %arg5[%c0_12, %c0_13] : memref<1x128xf32, #tpu.memory_space<vmem>>, vector<1x128xf32>
      %14 = vector.broadcast %13 : vector<1x128xf32> to vector<128x128xf32>
      %15 = arith.addf %12, %14 : vector<128x128xf32>
      %cst_14 = arith.constant 0.000000e+00 : f32
      %16 = vector.broadcast %cst_14 : f32 to vector<128x128xf32>
      %17 = arith.cmpf oge, %15, %16 : vector<128x128xf32>
      %cst_15 = arith.constant 2.000000e-01 : f32
      %18 = vector.broadcast %cst_15 : f32 to vector<128x128xf32>
      %19 = arith.mulf %18, %15 : vector<128x128xf32>
      %20 = arith.select %17, %15, %19 : vector<128x128xi1>, vector<128x128xf32>
      %21 = arith.truncf %20 : vector<128x128xf32> to vector<128x128xbf16>
      %c0_16 = arith.constant 0 : index
      %c0_17 = arith.constant 0 : index
      %22 = vector.load %arg6[%c0_16, %c0_17] : memref<128x128xbf16, #tpu.memory_space<vmem>>, vector<128x128xbf16>
      tpu.vector_store %arg6[%c0_16, %c0_17], %21 {strides = array<i32>} : memref<128x128xbf16, #tpu.memory_space<vmem>>, vector<128x128xbf16>,
    } else {
    }
    return
  }
  func.func @transform_0(%arg0: i32, %arg1: i32, %arg2: i32) -> (i32, i32) {
    %c0_i32 = arith.constant 0 : i32
    return %arg0, %arg2 : i32, i32
  }
  func.func @transform_1(%arg0: i32, %arg1: i32, %arg2: i32) -> (i32, i32) {
    %c0_i32 = arith.constant 0 : i32
    return %arg2, %arg1 : i32, i32
  }
  func.func @transform_2(%arg0: i32, %arg1: i32, %arg2: i32) -> (i32, i32) {
    %c0_i32 = arith.constant 0 : i32
    %c0_i32_0 = arith.constant 0 : i32
    return %c0_i32, %arg1 : i32, i32
  }
  func.func @transform_3(%arg0: i32, %arg1: i32, %arg2: i32) -> (i32, i32) {
    %c0_i32 = arith.constant 0 : i32
    return %arg0, %arg1 : i32, i32
  }
}

</mosaic_0001>

<llo_original>
// kernel: tpu_custom_call.1
$region0: #{tpu_custom_call.1}
  #allocation0 [shape = 'u32[]', space=smem, size = 0x4, offset = 0x4, fixed_abs, tag = 'smem constant byte address 0x4 - core index']
  #allocation1 [shape = 'u32[144,128]{1,0:T(1,128)}', space=vmem, size = 0x12000, scoped, tag = 'internal scratch']
  #allocation2 [shape = 'bf16[128,128]{1,0:T(16,128)(2,1)}', space=vmem, size = 0x8000, scoped, tag = 'scratch operand']
  #allocation3 [shape = 'bf16[128,128]{1,0:T(16,128)(2,1)}', space=vmem, size = 0x8000, scoped, tag = 'scratch operand']
  %s0 = inlined_call_operand.hbm [shape: bf16[128,128], index: 0, kind: input, shape index: {}]
  %s1 = inlined_call_operand.hbm [shape: bf16[128,128], index: 1, kind: input, shape index: {}]
  %s2 = inlined_call_operand.vmem [shape: f32[1,128], index: 2, kind: input, shape index: {}]
  %s3 = inlined_call_operand.hbm [shape: bf16[128,128], index: 3, kind: input, shape index: {}]
  %s4 = inlined_call_operand.vmem [shape: f32[1,128], index: 4, kind: input, shape index: {}]
  %s5 = inlined_call_operand.hbm [shape: bf16[128,128], index: 5, kind: input, shape index: {}]
  %s6 = inlined_call_operand.vmem [shape: f32[1,128], index: 6, kind: input, shape index: {}]
  %s7 = inlined_call_operand.hbm [shape: f32[128,128], index: 7, kind: output, shape index: {}]
  %s8 = sld [smem:[#allocation0]]
  $region54: #{tpu_custom_call.1} parent=0
    _
  %s10 = ssub.s32 1, %s8
  %s11 = scalar_select 0, %s10, %s8
  $region1: #{tpu_custom_call.1} parent=0
    #allocation4 [shape = 'u8[32768]{0}', space=vmem, size = 0x8000, scoped, tag = 'input window, operand 0, single buffered']
    #allocation5 [shape = 's32[1]{0}', space=sflag, size = 0x4, scoped, tag = 'scoped memory for tpu_custom_call.1']
    #allocation6 [shape = 's32[1]{0}', space=sflag, size = 0x4, scoped, tag = 'scoped memory for tpu_custom_call.1']
    #allocation7 [shape = 'u8[32768]{0}', space=vmem, size = 0x8000, scoped, tag = 'input window, operand 1, single buffered']
    #allocation8 [shape = 's32[1]{0}', space=sflag, size = 0x4, scoped, tag = 'scoped memory for tpu_custom_call.1']
    #allocation9 [shape = 'u8[32768]{0}', space=vmem, size = 0x8000, scoped, tag = 'input window, operand 3, single buffered']
    #allocation10 [shape = 'u8[32768]{0}', space=vmem, size = 0x8000, scoped, tag = 'input window, operand 5, single buffered']
    #allocation11 [shape = 's32[1]{0}', space=sflag, size = 0x4, scoped, tag = 'scoped memory for tpu_custom_call.1']
    #allocation12 [shape = 'u8[65536]{0}', space=vmem, size = 0x10000, scoped, tag = 'output window, operand 0, single buffered']
    %12 = vsyncpa [#allocation5], 0
    %13 = vsyncpa [#allocation8], 0
    %14 = vsyncpa [#allocation11], 0
    %15 = vsyncpa [#allocation6], 0
    // Predicated region
    $region2: #{tpu_custom_call.1} parent=1 // pred_check
      _
    $region3: #{tpu_custom_call.1} parent=1 // pred_check_branch
      %17 = sbr.rel (0) target = $region5
    $region4: #{tpu_custom_call.1} parent=1 // pred_region
      %s19 = ssub.s32 1024, 1024
      %20 = vsyncadd [#allocation5], %s19
      %s21 = sshll.u32 [#allocation4], 4
      %s22 = int_to_ptr.vmem [resolvable:$true] %s21
      %27 = dma.hbm_to_vmem [thread:$0]  %s0, 1024, %s22, [#allocation5], 64, 64, 4
    $region5: #{tpu_custom_call.1} parent=1 // pred_fallthru
      _
    // Predicated region
    $region6: #{tpu_custom_call.1} parent=1 // pred_check
      _
    $region7: #{tpu_custom_call.1} parent=1 // pred_check_branch
      %29 = sbr.rel (0) target = $region9
    $region8: #{tpu_custom_call.1} parent=1 // pred_region
      %s31 = ssub.s32 1024, 1024
      %32 = vsyncadd [#allocation8], %s31
      %s33 = sshll.u32 [#allocation7], 4
      %s34 = int_to_ptr.vmem [resolvable:$true] %s33
      %39 = dma.hbm_to_vmem [thread:$0]  %s1, 1024, %s34, [#allocation8], 64, 64, 4
    $region9: #{tpu_custom_call.1} parent=1 // pred_fallthru
      _
    // Predicated region
    $region10: #{tpu_custom_call.1} parent=1 // pred_check
      _
    $region11: #{tpu_custom_call.1} parent=1 // pred_check_branch
      %41 = sbr.rel (0) target = $region13
    $region12: #{tpu_custom_call.1} parent=1 // pred_region
      _
    $region13: #{tpu_custom_call.1} parent=1 // pred_fallthru
      _
    // Predicated region
    $region14: #{tpu_custom_call.1} parent=1 // pred_check
      _
    $region15: #{tpu_custom_call.1} parent=1 // pred_check_branch
      %43 = sbr.rel (0) target = $region17
    $region16: #{tpu_custom_call.1} parent=1 // pred_region
      %s45 = ssub.s32 1024, 1024
      %46 = vsyncadd [#allocation8], %s45
      %s47 = sshll.u32 [#allocation9], 4
      %s48 = int_to_ptr.vmem [resolvable:$true] %s47
      %53 = dma.hbm_to_vmem [thread:$0]  %s3, 1024, %s48, [#allocation8], 64, 64, 4
    $region17: #{tpu_custom_call.1} parent=1 // pred_fallthru
      _
    // Predicated region
    $region18: #{tpu_custom_call.1} parent=1 // pred_check
      _
    $region19: #{tpu_custom_call.1} parent=1 // pred_check_branch
      %55 = sbr.rel (0) target = $region21
    $region20: #{tpu_custom_call.1} parent=1 // pred_region
      _
    $region21: #{tpu_custom_call.1} parent=1 // pred_fallthru
      _
    // Predicated region
    $region22: #{tpu_custom_call.1} parent=1 // pred_check
      _
    $region23: #{tpu_custom_call.1} parent=1 // pred_check_branch
      %57 = sbr.rel (0) target = $region25
    $region24: #{tpu_custom_call.1} parent=1 // pred_region
      %s59 = ssub.s32 1024, 1024
      %60 = vsyncadd [#allocation11], %s59
      %s61 = sshll.u32 [#allocation10], 4
      %s62 = int_to_ptr.vmem [resolvable:$true] %s61
      %67 = dma.hbm_to_vmem [thread:$0]  %s5, 1024, %s62, [#allocation11], 64, 64, 4
    $region25: #{tpu_custom_call.1} parent=1 // pred_fallthru
      _
    // Predicated region
    $region26: #{tpu_custom_call.1} parent=1 // pred_check
      _
    $region27: #{tpu_custom_call.1} parent=1 // pred_check_branch
      %69 = sbr.rel (0) target = $region29
    $region28: #{tpu_custom_call.1} parent=1 // pred_region
      _
    $region29: #{tpu_custom_call.1} parent=1 // pred_fallthru
      _
    // Predicated region
    $region30: #{tpu_custom_call.1} parent=1 // pred_check
      _
    $region31: #{tpu_custom_call.1} parent=1 // pred_check_branch
      %71 = sbr.rel (0) target = $region33
    $region32: #{tpu_custom_call.1} parent=1 // pred_region
      %72 = dma.done [#allocation5], 1024
    $region33: #{tpu_custom_call.1} parent=1 // pred_fallthru
      _
    // Predicated region
    $region34: #{tpu_custom_call.1} parent=1 // pred_check
      _
    $region35: #{tpu_custom_call.1} parent=1 // pred_check_branch
      %74 = sbr.rel (0) target = $region37
    $region36: #{tpu_custom_call.1} parent=1 // pred_region
      %75 = dma.done [#allocation8], 1024
    $region37: #{tpu_custom_call.1} parent=1 // pred_fallthru
      _
    // Predicated region
    $region38: #{tpu_custom_call.1} parent=1 // pred_check
      _
    $region39: #{tpu_custom_call.1} parent=1 // pred_check_branch
      %77 = sbr.rel (0) target = $region41
    $region40: #{tpu_custom_call.1} parent=1 // pred_region
      %78 = dma.done [#allocation8], 1024
    $region41: #{tpu_custom_call.1} parent=1 // pred_fallthru
      _
    // Predicated region
    $region42: #{tpu_custom_call.1} parent=1 // pred_check
      _
    $region43: #{tpu_custom_call.1} parent=1 // pred_check_branch
      %80 = sbr.rel (0) target = $region45
    $region44: #{tpu_custom_call.1} parent=1 // pred_region
      %81 = dma.done [#allocation11], 1024
    $region45: #{tpu_custom_call.1} parent=1 // pred_fallthru
      _
    %v83 = vld [vmem:[#allocation4] sm:$0xf]
    %v84 = vld [vmem:[#allocation4 + $0x4] sm:$0xf]
    %v85 = vld [vmem:[#allocation4 + $0x8] sm:$0xf]
    %v86 = vld [vmem:[#allocation4 + $0xc] sm:$0xf]
    %v87 = vld [vmem:[#allocation4 + $0x10] sm:$0xf]
    %v88 = vld [vmem:[#allocation4 + $0x14] sm:$0xf]
    %v89 = vld [vmem:[#allocation4 + $0x18] sm:$0xf]
    %v90 = vld [vmem:[#allocation4 + $0x1c] sm:$0xf]
    %v91 = vld [vmem:[#allocation4 + $0x20] sm:$0xf]
    %v92 = vld [vmem:[#allocation4 + $0x24] sm:$0xf]
    %v93 = vld [vmem:[#allocation4 + $0x28] sm:$0xf]
    %v94 = vld [vmem:[#allocation4 + $0x2c] sm:$0xf]
    %v95 = vld [vmem:[#allocation4 + $0x30] sm:$0xf]
    %v96 = vld [vmem:[#allocation4 + $0x34] sm:$0xf]
    %v97 = vld [vmem:[#allocation4 + $0x38] sm:$0xf]
    %v98 = vld [vmem:[#allocation4 + $0x3c] sm:$0xf]
    %v99 = vld [vmem:[#allocation7] sm:$0xf]
    %v100 = vld [vmem:[#allocation7 + $0x4] sm:$0xf]
    %v101 = vld [vmem:[#allocation7 + $0x8] sm:$0xf]
    %v102 = vld [vmem:[#allocation7 + $0xc] sm:$0xf]
    %v103 = vld [vmem:[#allocation7 + $0x10] sm:$0xf]
    %v104 = vld [vmem:[#allocation7 + $0x14] sm:$0xf]
    %v105 = vld [vmem:[#allocation7 + $0x18] sm:$0xf]
    %v106 = vld [vmem:[#allocation7 + $0x1c] sm:$0xf]
    %v107 = vld [vmem:[#allocation7 + $0x20] sm:$0xf]
    %v108 = vld [vmem:[#allocation7 + $0x24] sm:$0xf]
    %v109 = vld [vmem:[#allocation7 + $0x28] sm:$0xf]
    %v110 = vld [vmem:[#allocation7 + $0x2c] sm:$0xf]
    %v111 = vld [vmem:[#allocation7 + $0x30] sm:$0xf]
    %v112 = vld [vmem:[#allocation7 + $0x34] sm:$0xf]
    %v113 = vld [vmem:[#allocation7 + $0x38] sm:$0xf]
    %v114 = vld [vmem:[#allocation7 + $0x3c] sm:$0xf]
    %v115 = vld [vmem:[%s2] sm:$0x1]
    %v117 = vlaneseq
    %v118 = vshrl.u32 %v117, 7
    %v119 = vsub.s32 0, %v118
    %v120 = vrot.slane %v115, %v119
    %v138 = vunpack.c.l.b16 %v83
    %v139 = vunpack.c.l.b16 %v84
    %v140 = vunpack.c.l.b16 %v85
    %v141 = vunpack.c.l.b16 %v86
    %v142 = vunpack.c.l.b16 %v87
    %v143 = vunpack.c.l.b16 %v88
    %v144 = vunpack.c.l.b16 %v89
    %v145 = vunpack.c.l.b16 %v90
    %v146 = vunpack.c.l.b16 %v91
    %v147 = vunpack.c.l.b16 %v92
    %v148 = vunpack.c.l.b16 %v93
    %v149 = vunpack.c.l.b16 %v94
    %v150 = vunpack.c.l.b16 %v95
    %v151 = vunpack.c.l.b16 %v96
    %v152 = vunpack.c.l.b16 %v97
    %v153 = vunpack.c.l.b16 %v98
    %v154 = vpack.c.b16 %v139, %v138
    %v155 = vpack.c.b16 %v141, %v140
    %v156 = vpack.c.b16 %v143, %v142
    %v157 = vpack.c.b16 %v145, %v144
    %v158 = vpack.c.b16 %v147, %v146
    %v159 = vpack.c.b16 %v149, %v148
    %v160 = vpack.c.b16 %v151, %v150
    %v161 = vpack.c.b16 %v153, %v152
    %v186 = vunpack.c.l.b16 %v99
    %v187 = vunpack.c.l.b16 %v100
    %v188 = vunpack.c.l.b16 %v101
    %v189 = vunpack.c.l.b16 %v102
    %v190 = vunpack.c.l.b16 %v103
    %v191 = vunpack.c.l.b16 %v104
    %v192 = vunpack.c.l.b16 %v105
    %v193 = vunpack.c.l.b16 %v106
    %v194 = vunpack.c.l.b16 %v107
    %v195 = vunpack.c.l.b16 %v108
    %v196 = vunpack.c.l.b16 %v109
    %v197 = vunpack.c.l.b16 %v110
    %v198 = vunpack.c.l.b16 %v111
    %v199 = vunpack.c.l.b16 %v112
    %v200 = vunpack.c.l.b16 %v113
    %v201 = vunpack.c.l.b16 %v114
    %v202 = vpack.c.b16 %v187, %v186
    %v203 = vpack.c.b16 %v189, %v188
    %v204 = vpack.c.b16 %v191, %v190
    %v205 = vpack.c.b16 %v193, %v192
    %v206 = vpack.c.b16 %v195, %v194
    %v207 = vpack.c.b16 %v197, %v196
    %v208 = vpack.c.b16 %v199, %v198
    %v209 = vpack.c.b16 %v201, %v200
    %218 = vmatprep.subr.bf16.mxu0 0
    %219 = vmatpush1.bf16.msra.mxu0 %v202
    %220 = vmatprep.subr.bf16.mxu0 0
    %221 = vmatpush1.bf16.msra.mxu0 %v203
    %222 = vmatprep.subr.bf16.mxu0 0
    %223 = vmatpush1.bf16.msra.mxu0 %v204
    %224 = vmatprep.subr.bf16.mxu0 0
    %225 = vmatpush1.bf16.msra.mxu0 %v205
    %226 = vmatprep.subr.bf16.mxu0 0
    %227 = vmatpush1.bf16.msra.mxu0 %v206
    %228 = vmatprep.subr.bf16.mxu0 0
    %229 = vmatpush1.bf16.msra.mxu0 %v207
    %230 = vmatprep.subr.bf16.mxu0 0
    %231 = vmatpush1.bf16.msra.mxu0 %v208
    %232 = vmatprep.subr.bf16.mxu0 0
    %233 = vmatpush1.bf16.msra.mxu0 %v209
    %234 = vmatprep.subr.bf16.mxu0 0
    %235 = vmatpush1.bf16.msra.mxu0 0
    %236 = vmatprep.subr.bf16.mxu0 0
    %237 = vmatpush1.bf16.msra.mxu0 0
    %238 = vmatprep.subr.bf16.mxu0 0
    %239 = vmatpush1.bf16.msra.mxu0 0
    %240 = vmatprep.subr.bf16.mxu0 0
    %241 = vmatpush1.bf16.msra.mxu0 0
    %242 = vmatprep.subr.bf16.mxu0 0
    %243 = vmatpush1.bf16.msra.mxu0 0
    %244 = vmatprep.subr.bf16.mxu0 0
    %245 = vmatpush1.bf16.msra.mxu0 0
    %246 = vmatprep.subr.bf16.mxu0 0
    %247 = vmatpush1.bf16.msra.mxu0 0
    %248 = vmatprep.subr.bf16.mxu0 0
    %249 = vmatpush1.bf16.msra.mxu0 0
    %250 = vmatprep.mubr.bf16.mxu0 0
    %251 = vmatmul.mubr.bf16.gmra.mrb[0].mxu0 %v154
    %v252 = vpop.f32.mrb[0].mxu0
    %v253 = vadd.f32 %v120, %v252
    %v254 = vpop.f32.mrb[0].mxu0
    %v255 = vpop.f32.mrb[0].mxu0
    %v256 = vadd.f32 %v120, %v255
    %v257 = vpop.f32.mrb[0].mxu0
    %258 = vmatprep.mubr.bf16.mxu0 0
    %259 = vmatmul.mubr.bf16.gmra.mrb[0].mxu0 %v155
    %v260 = vpop.f32.mrb[0].mxu0
    %v261 = vadd.f32 %v120, %v260
    %v262 = vpop.f32.mrb[0].mxu0
    %v263 = vpop.f32.mrb[0].mxu0
    %v264 = vadd.f32 %v120, %v263
    %v265 = vpop.f32.mrb[0].mxu0
    %266 = vmatprep.mubr.bf16.mxu0 0
    %267 = vmatmul.mubr.bf16.gmra.mrb[0].mxu0 %v156
    %v268 = vpop.f32.mrb[0].mxu0
    %v269 = vadd.f32 %v120, %v268
    %v270 = vpop.f32.mrb[0].mxu0
    %v271 = vpop.f32.mrb[0].mxu0
    %v272 = vadd.f32 %v120, %v271
    %v273 = vpop.f32.mrb[0].mxu0
    %274 = vmatprep.mubr.bf16.mxu0 0
    %275 = vmatmul.mubr.bf16.gmra.mrb[0].mxu0 %v157
    %v276 = vpop.f32.mrb[0].mxu0
    %v277 = vadd.f32 %v120, %v276
    %v278 = vpop.f32.mrb[0].mxu0
    %v279 = vpop.f32.mrb[0].mxu0
    %v280 = vadd.f32 %v120, %v279
    %v281 = vpop.f32.mrb[0].mxu0
    %282 = vmatprep.mubr.bf16.mxu0 0
    %283 = vmatmul.mubr.bf16.gmra.mrb[0].mxu0 %v158
    %v284 = vpop.f32.mrb[0].mxu0
    %v285 = vadd.f32 %v120, %v284
    %v286 = vpop.f32.mrb[0].mxu0
    %v287 = vpop.f32.mrb[0].mxu0
    %v288 = vadd.f32 %v120, %v287
    %v289 = vpop.f32.mrb[0].mxu0
    %290 = vmatprep.mubr.bf16.mxu0 0
    %291 = vmatmul.mubr.bf16.gmra.mrb[0].mxu0 %v159
    %v292 = vpop.f32.mrb[0].mxu0
    %v293 = vadd.f32 %v120, %v292
    %v294 = vpop.f32.mrb[0].mxu0
    %v295 = vpop.f32.mrb[0].mxu0
    %v296 = vadd.f32 %v120, %v295
    %v297 = vpop.f32.mrb[0].mxu0
    %298 = vmatprep.mubr.bf16.mxu0 0
    %299 = vmatmul.mubr.bf16.gmra.mrb[0].mxu0 %v160
    %v300 = vpop.f32.mrb[0].mxu0
    %v301 = vadd.f32 %v120, %v300
    %v302 = vpop.f32.mrb[0].mxu0
    %v303 = vpop.f32.mrb[0].mxu0
    %v304 = vadd.f32 %v120, %v303
    %v305 = vpop.f32.mrb[0].mxu0
    %306 = vmatprep.mubr.bf16.mxu0 0
    %307 = vmatmul.mubr.bf16.gmra.mrb[0].mxu0 %v161
    %v308 = vpop.f32.mrb[0].mxu0
    %v309 = vadd.f32 %v120, %v308
    %v310 = vpop.f32.mrb[0].mxu0
    %v311 = vpop.f32.mrb[0].mxu0
    %v312 = vadd.f32 %v120, %v311
    %v313 = vpop.f32.mrb[0].mxu0
    %314 = vdwg.mxu0
    %vm315 = vcmp.ge.f32.partialorder %v253, 0.0
    %vm316 = vcmp.ge.f32.partialorder %v256, 0.0
    %vm317 = vcmp.ge.f32.partialorder %v261, 0.0
    %vm318 = vcmp.ge.f32.partialorder %v264, 0.0
    %vm319 = vcmp.ge.f32.partialorder %v269, 0.0
    %vm320 = vcmp.ge.f32.partialorder %v272, 0.0
    %vm321 = vcmp.ge.f32.partialorder %v277, 0.0
    %vm322 = vcmp.ge.f32.partialorder %v280, 0.0
    %vm323 = vcmp.ge.f32.partialorder %v285, 0.0
    %vm324 = vcmp.ge.f32.partialorder %v288, 0.0
    %vm325 = vcmp.ge.f32.partialorder %v293, 0.0
    %vm326 = vcmp.ge.f32.partialorder %v296, 0.0
    %vm327 = vcmp.ge.f32.partialorder %v301, 0.0
    %vm328 = vcmp.ge.f32.partialorder %v304, 0.0
    %vm329 = vcmp.ge.f32.partialorder %v309, 0.0
    %vm330 = vcmp.ge.f32.partialorder %v312, 0.0
    %v331 = vmul.f32 %v253, 0.2
    %v332 = vmul.f32 %v256, 0.2
    %v333 = vmul.f32 %v261, 0.2
    %v334 = vmul.f32 %v264, 0.2
    %v335 = vmul.f32 %v269, 0.2
    %v336 = vmul.f32 %v272, 0.2
    %v337 = vmul.f32 %v277, 0.2
    %v338 = vmul.f32 %v280, 0.2
    %v339 = vmul.f32 %v285, 0.2
    %v340 = vmul.f32 %v288, 0.2
    %v341 = vmul.f32 %v293, 0.2
    %v342 = vmul.f32 %v296, 0.2
    %v343 = vmul.f32 %v301, 0.2
    %v344 = vmul.f32 %v304, 0.2
    %v345 = vmul.f32 %v309, 0.2
    %v346 = vmul.f32 %v312, 0.2
    %v347 = vsel %vm315, %v253, %v331
    %v348 = vsel %vm316, %v256, %v332
    %v349 = vsel %vm317, %v261, %v333
    %v350 = vsel %vm318, %v264, %v334
    %v351 = vsel %vm319, %v269, %v335
    %v352 = vsel %vm320, %v272, %v336
    %v353 = vsel %vm321, %v277, %v337
    %v354 = vsel %vm322, %v280, %v338
    %v355 = vsel %vm323, %v285, %v339
    %v356 = vsel %vm324, %v288, %v340
    %v357 = vsel %vm325, %v293, %v341
    %v358 = vsel %vm326, %v296, %v342
    %v359 = vsel %vm327, %v301, %v343
    %v360 = vsel %vm328, %v304, %v344
    %v361 = vsel %vm329, %v309, %v345
    %v362 = vsel %vm330, %v312, %v346
    %v363 = vpack.c.bf16 %v348, %v347
    %v364 = vpack.c.bf16 %v350, %v349
    %v365 = vpack.c.bf16 %v352, %v351
    %v366 = vpack.c.bf16 %v354, %v353
    %v367 = vpack.c.bf16 %v356, %v355
    %v368 = vpack.c.bf16 %v358, %v357
    %v369 = vpack.c.bf16 %v360, %v359
    %v370 = vpack.c.bf16 %v362, %v361
    %371 = vst [vmem:[#allocation2] sm:$0xff] %v363
    %372 = vst [vmem:[#allocation2 + $0x8] sm:$0xff] %v364
    %373 = vst [vmem:[#allocation2 + $0x10] sm:$0xff] %v365
    %374 = vst [vmem:[#allocation2 + $0x18] sm:$0xff] %v366
    %375 = vst [vmem:[#allocation2 + $0x20] sm:$0xff] %v367
    %376 = vst [vmem:[#allocation2 + $0x28] sm:$0xff] %v368
    %377 = vst [vmem:[#allocation2 + $0x30] sm:$0xff] %v369
    %378 = vst [vmem:[#allocation2 + $0x38] sm:$0xff] %v370
    %v379 = vld [vmem:[#allocation2] sm:$0xff]
    %v380 = vld [vmem:[#allocation2 + $0x8] sm:$0xff]
    %v381 = vld [vmem:[#allocation2 + $0x10] sm:$0xff]
    %v382 = vld [vmem:[#allocation2 + $0x18] sm:$0xff]
    %v383 = vld [vmem:[#allocation2 + $0x20] sm:$0xff]
    %v384 = vld [vmem:[#allocation2 + $0x28] sm:$0xff]
    %v385 = vld [vmem:[#allocation2 + $0x30] sm:$0xff]
    %v386 = vld [vmem:[#allocation2 + $0x38] sm:$0xff]
    %v387 = vld [vmem:[#allocation9] sm:$0xf]
    %v388 = vld [vmem:[#allocation9 + $0x4] sm:$0xf]
    %v389 = vld [vmem:[#allocation9 + $0x8] sm:$0xf]
    %v390 = vld [vmem:[#allocation9 + $0xc] sm:$0xf]
    %v391 = vld [vmem:[#allocation9 + $0x10] sm:$0xf]
    %v392 = vld [vmem:[#allocation9 + $0x14] sm:$0xf]
    %v393 = vld [vmem:[#allocation9 + $0x18] sm:$0xf]
    %v394 = vld [vmem:[#allocation9 + $0x1c] sm:$0xf]
    %v395 = vld [vmem:[#allocation9 + $0x20] sm:$0xf]
    %v396 = vld [vmem:[#allocation9 + $0x24] sm:$0xf]
    %v397 = vld [vmem:[#allocation9 + $0x28] sm:$0xf]
    %v398 = vld [vmem:[#allocation9 + $0x2c] sm:$0xf]
    %v399 = vld [vmem:[#allocation9 + $0x30] sm:$0xf]
    %v400 = vld [vmem:[#allocation9 + $0x34] sm:$0xf]
    %v401 = vld [vmem:[#allocation9 + $0x38] sm:$0xf]
    %v402 = vld [vmem:[#allocation9 + $0x3c] sm:$0xf]
    %v403 = vld [vmem:[%s4] sm:$0x1]
    %v405 = vlaneseq
    %v406 = vshrl.u32 %v405, 7
    %v407 = vsub.s32 0, %v406
    %v408 = vrot.slane %v403, %v407
    %v426 = vunpack.c.l.b16 %v387
    %v427 = vunpack.c.l.b16 %v388
    %v428 = vunpack.c.l.b16 %v389
    %v429 = vunpack.c.l.b16 %v390
    %v430 = vunpack.c.l.b16 %v391
    %v431 = vunpack.c.l.b16 %v392
    %v432 = vunpack.c.l.b16 %v393
    %v433 = vunpack.c.l.b16 %v394
    %v434 = vunpack.c.l.b16 %v395
    %v435 = vunpack.c.l.b16 %v396
    %v436 = vunpack.c.l.b16 %v397
    %v437 = vunpack.c.l.b16 %v398
    %v438 = vunpack.c.l.b16 %v399
    %v439 = vunpack.c.l.b16 %v400
    %v440 = vunpack.c.l.b16 %v401
    %v441 = vunpack.c.l.b16 %v402
    %v442 = vpack.c.b16 %v427, %v426
    %v443 = vpack.c.b16 %v429, %v428
    %v444 = vpack.c.b16 %v431, %v430
    %v445 = vpack.c.b16 %v433, %v432
    %v446 = vpack.c.b16 %v435, %v434
    %v447 = vpack.c.b16 %v437, %v436
    %v448 = vpack.c.b16 %v439, %v438
    %v449 = vpack.c.b16 %v441, %v440
    %458 = vmatprep.subr.bf16.mxu0 0
    %459 = vmatpush1.bf16.msra.mxu0 %v442
    %460 = vmatprep.subr.bf16.mxu0 0
    %461 = vmatpush1.bf16.msra.mxu0 %v443
    %462 = vmatprep.subr.bf16.mxu0 0
    %463 = vmatpush1.bf16.msra.mxu0 %v444
    %464 = vmatprep.subr.bf16.mxu0 0
    %465 = vmatpush1.bf16.msra.mxu0 %v445
    %466 = vmatprep.subr.bf16.mxu0 0
    %467 = vmatpush1.bf16.msra.mxu0 %v446
    %468 = vmatprep.subr.bf16.mxu0 0
    %469 = vmatpush1.bf16.msra.mxu0 %v447
    %470 = vmatprep.subr.bf16.mxu0 0
    %471 = vmatpush1.bf16.msra.mxu0 %v448
    %472 = vmatprep.subr.bf16.mxu0 0
    %473 = vmatpush1.bf16.msra.mxu0 %v449
    %474 = vmatprep.subr.bf16.mxu0 0
    %475 = vmatpush1.bf16.msra.mxu0 0
    %476 = vmatprep.subr.bf16.mxu0 0
    %477 = vmatpush1.bf16.msra.mxu0 0
    %478 = vmatprep.subr.bf16.mxu0 0
    %479 = vmatpush1.bf16.msra.mxu0 0
    %480 = vmatprep.subr.bf16.mxu0 0
    %481 = vmatpush1.bf16.msra.mxu0 0
    %482 = vmatprep.subr.bf16.mxu0 0
    %483 = vmatpush1.bf16.msra.mxu0 0
    %484 = vmatprep.subr.bf16.mxu0 0
    %485 = vmatpush1.bf16.msra.mxu0 0
    %486 = vmatprep.subr.bf16.mxu0 0
    %487 = vmatpush1.bf16.msra.mxu0 0
    %488 = vmatprep.subr.bf16.mxu0 0
    %489 = vmatpush1.bf16.msra.mxu0 0
    %490 = vmatprep.mubr.bf16.mxu0 0
    %491 = vmatmul.mubr.bf16.gmra.mrb[0].mxu0 %v379
    %v492 = vpop.f32.mrb[0].mxu0
    %v493 = vadd.f32 %v408, %v492
    %v494 = vpop.f32.mrb[0].mxu0
    %v495 = vpop.f32.mrb[0].mxu0
    %v496 = vadd.f32 %v408, %v495
    %v497 = vpop.f32.mrb[0].mxu0
    %498 = vmatprep.mubr.bf16.mxu0 0
    %499 = vmatmul.mubr.bf16.gmra.mrb[0].mxu0 %v380
    %v500 = vpop.f32.mrb[0].mxu0
    %v501 = vadd.f32 %v408, %v500
    %v502 = vpop.f32.mrb[0].mxu0
    %v503 = vpop.f32.mrb[0].mxu0
    %v504 = vadd.f32 %v408, %v503
    %v505 = vpop.f32.mrb[0].mxu0
    %506 = vmatprep.mubr.bf16.mxu0 0
    %507 = vmatmul.mubr.bf16.gmra.mrb[0].mxu0 %v381
    %v508 = vpop.f32.mrb[0].mxu0
    %v509 = vadd.f32 %v408, %v508
    %v510 = vpop.f32.mrb[0].mxu0
    %v511 = vpop.f32.mrb[0].mxu0
    %v512 = vadd.f32 %v408, %v511
    %v513 = vpop.f32.mrb[0].mxu0
    %514 = vmatprep.mubr.bf16.mxu0 0
    %515 = vmatmul.mubr.bf16.gmra.mrb[0].mxu0 %v382
    %v516 = vpop.f32.mrb[0].mxu0
    %v517 = vadd.f32 %v408, %v516
    %v518 = vpop.f32.mrb[0].mxu0
    %v519 = vpop.f32.mrb[0].mxu0
    %v520 = vadd.f32 %v408, %v519
    %v521 = vpop.f32.mrb[0].mxu0
    %522 = vmatprep.mubr.bf16.mxu0 0
    %523 = vmatmul.mubr.bf16.gmra.mrb[0].mxu0 %v383
    %v524 = vpop.f32.mrb[0].mxu0
    %v525 = vadd.f32 %v408, %v524
    %v526 = vpop.f32.mrb[0].mxu0
    %v527 = vpop.f32.mrb[0].mxu0
    %v528 = vadd.f32 %v408, %v527
    %v529 = vpop.f32.mrb[0].mxu0
    %530 = vmatprep.mubr.bf16.mxu0 0
    %531 = vmatmul.mubr.bf16.gmra.mrb[0].mxu0 %v384
    %v532 = vpop.f32.mrb[0].mxu0
    %v533 = vadd.f32 %v408, %v532
    %v534 = vpop.f32.mrb[0].mxu0
    %v535 = vpop.f32.mrb[0].mxu0
    %v536 = vadd.f32 %v408, %v535
    %v537 = vpop.f32.mrb[0].mxu0
    %538 = vmatprep.mubr.bf16.mxu0 0
    %539 = vmatmul.mubr.bf16.gmra.mrb[0].mxu0 %v385
    %v540 = vpop.f32.mrb[0].mxu0
    %v541 = vadd.f32 %v408, %v540
    %v542 = vpop.f32.mrb[0].mxu0
    %v543 = vpop.f32.mrb[0].mxu0
    %v544 = vadd.f32 %v408, %v543
    %v545 = vpop.f32.mrb[0].mxu0
    %546 = vmatprep.mubr.bf16.mxu0 0
    %547 = vmatmul.mubr.bf16.gmra.mrb[0].mxu0 %v386
    %v548 = vpop.f32.mrb[0].mxu0
    %v549 = vadd.f32 %v408, %v548
    %v550 = vpop.f32.mrb[0].mxu0
    %v551 = vpop.f32.mrb[0].mxu0
    %v552 = vadd.f32 %v408, %v551
    %v553 = vpop.f32.mrb[0].mxu0
    %554 = vdwg.mxu0
    %vm555 = vcmp.ge.f32.partialorder %v493, 0.0
    %vm556 = vcmp.ge.f32.partialorder %v496, 0.0
    %vm557 = vcmp.ge.f32.partialorder %v501, 0.0
    %vm558 = vcmp.ge.f32.partialorder %v504, 0.0
    %vm559 = vcmp.ge.f32.partialorder %v509, 0.0
    %vm560 = vcmp.ge.f32.partialorder %v512, 0.0
    %vm561 = vcmp.ge.f32.partialorder %v517, 0.0
    %vm562 = vcmp.ge.f32.partialorder %v520, 0.0
    %vm563 = vcmp.ge.f32.partialorder %v525, 0.0
    %vm564 = vcmp.ge.f32.partialorder %v528, 0.0
    %vm565 = vcmp.ge.f32.partialorder %v533, 0.0
    %vm566 = vcmp.ge.f32.partialorder %v536, 0.0
    %vm567 = vcmp.ge.f32.partialorder %v541, 0.0
    %vm568 = vcmp.ge.f32.partialorder %v544, 0.0
    %vm569 = vcmp.ge.f32.partialorder %v549, 0.0
    %vm570 = vcmp.ge.f32.partialorder %v552, 0.0
    %v571 = vmul.f32 %v493, 0.2
    %v572 = vmul.f32 %v496, 0.2
    %v573 = vmul.f32 %v501, 0.2
    %v574 = vmul.f32 %v504, 0.2
    %v575 = vmul.f32 %v509, 0.2
    %v576 = vmul.f32 %v512, 0.2
    %v577 = vmul.f32 %v517, 0.2
    %v578 = vmul.f32 %v520, 0.2
    %v579 = vmul.f32 %v525, 0.2
    %v580 = vmul.f32 %v528, 0.2
    %v581 = vmul.f32 %v533, 0.2
    %v582 = vmul.f32 %v536, 0.2
    %v583 = vmul.f32 %v541, 0.2
    %v584 = vmul.f32 %v544, 0.2
    %v585 = vmul.f32 %v549, 0.2
    %v586 = vmul.f32 %v552, 0.2
    %v587 = vsel %vm555, %v493, %v571
    %v588 = vsel %vm556, %v496, %v572
    %v589 = vsel %vm557, %v501, %v573
    %v590 = vsel %vm558, %v504, %v574
    %v591 = vsel %vm559, %v509, %v575
    %v592 = vsel %vm560, %v512, %v576
    %v593 = vsel %vm561, %v517, %v577
    %v594 = vsel %vm562, %v520, %v578
    %v595 = vsel %vm563, %v525, %v579
    %v596 = vsel %vm564, %v528, %v580
    %v597 = vsel %vm565, %v533, %v581
    %v598 = vsel %vm566, %v536, %v582
    %v599 = vsel %vm567, %v541, %v583
    %v600 = vsel %vm568, %v544, %v584
    %v601 = vsel %vm569, %v549, %v585
    %v602 = vsel %vm570, %v552, %v586
    %v603 = vpack.c.bf16 %v588, %v587
    %v604 = vpack.c.bf16 %v590, %v589
    %v605 = vpack.c.bf16 %v592, %v591
    %v606 = vpack.c.bf16 %v594, %v593
    %v607 = vpack.c.bf16 %v596, %v595
    %v608 = vpack.c.bf16 %v598, %v597
    %v609 = vpack.c.bf16 %v600, %v599
    %v610 = vpack.c.bf16 %v602, %v601
    %611 = vst [vmem:[#allocation3] sm:$0xff] %v603
    %612 = vst [vmem:[#allocation3 + $0x8] sm:$0xff] %v604
    %613 = vst [vmem:[#allocation3 + $0x10] sm:$0xff] %v605
    %614 = vst [vmem:[#allocation3 + $0x18] sm:$0xff] %v606
    %615 = vst [vmem:[#allocation3 + $0x20] sm:$0xff] %v607
    %616 = vst [vmem:[#allocation3 + $0x28] sm:$0xff] %v608
    %617 = vst [vmem:[#allocation3 + $0x30] sm:$0xff] %v609
    %618 = vst [vmem:[#allocation3 + $0x38] sm:$0xff] %v610
    %v619 = vld [vmem:[#allocation3] sm:$0xff]
    %v620 = vld [vmem:[#allocation3 + $0x8] sm:$0xff]
    %v621 = vld [vmem:[#allocation3 + $0x10] sm:$0xff]
    %v622 = vld [vmem:[#allocation3 + $0x18] sm:$0xff]
    %v623 = vld [vmem:[#allocation3 + $0x20] sm:$0xff]
    %v624 = vld [vmem:[#allocation3 + $0x28] sm:$0xff]
    %v625 = vld [vmem:[#allocation3 + $0x30] sm:$0xff]
    %v626 = vld [vmem:[#allocation3 + $0x38] sm:$0xff]
    %v627 = vld [vmem:[#allocation10] sm:$0xf]
    %v628 = vld [vmem:[#allocation10 + $0x4] sm:$0xf]
    %v629 = vld [vmem:[#allocation10 + $0x8] sm:$0xf]
    %v630 = vld [vmem:[#allocation10 + $0xc] sm:$0xf]
    %v631 = vld [vmem:[#allocation10 + $0x10] sm:$0xf]
    %v632 = vld [vmem:[#allocation10 + $0x14] sm:$0xf]
    %v633 = vld [vmem:[#allocation10 + $0x18] sm:$0xf]
    %v634 = vld [vmem:[#allocation10 + $0x1c] sm:$0xf]
    %v635 = vld [vmem:[#allocation10 + $0x20] sm:$0xf]
    %v636 = vld [vmem:[#allocation10 + $0x24] sm:$0xf]
    %v637 = vld [vmem:[#allocation10 + $0x28] sm:$0xf]
    %v638 = vld [vmem:[#allocation10 + $0x2c] sm:$0xf]
    %v639 = vld [vmem:[#allocation10 + $0x30] sm:$0xf]
    %v640 = vld [vmem:[#allocation10 + $0x34] sm:$0xf]
    %v641 = vld [vmem:[#allocation10 + $0x38] sm:$0xf]
    %v642 = vld [vmem:[#allocation10 + $0x3c] sm:$0xf]
    %v643 = vld [vmem:[%s6] sm:$0x1]
    %v645 = vlaneseq
    %v646 = vshrl.u32 %v645, 7
    %v647 = vsub.s32 0, %v646
    %v648 = vrot.slane %v643, %v647
    %v666 = vunpack.c.l.b16 %v627
    %v667 = vunpack.c.l.b16 %v628
    %v668 = vunpack.c.l.b16 %v629
    %v669 = vunpack.c.l.b16 %v630
    %v670 = vunpack.c.l.b16 %v631
    %v671 = vunpack.c.l.b16 %v632
    %v672 = vunpack.c.l.b16 %v633
    %v673 = vunpack.c.l.b16 %v634
    %v674 = vunpack.c.l.b16 %v635
    %v675 = vunpack.c.l.b16 %v636
    %v676 = vunpack.c.l.b16 %v637
    %v677 = vunpack.c.l.b16 %v638
    %v678 = vunpack.c.l.b16 %v639
    %v679 = vunpack.c.l.b16 %v640
    %v680 = vunpack.c.l.b16 %v641
    %v681 = vunpack.c.l.b16 %v642
    %v682 = vpack.c.b16 %v667, %v666
    %v683 = vpack.c.b16 %v669, %v668
    %v684 = vpack.c.b16 %v671, %v670
    %v685 = vpack.c.b16 %v673, %v672
    %v686 = vpack.c.b16 %v675, %v674
    %v687 = vpack.c.b16 %v677, %v676
    %v688 = vpack.c.b16 %v679, %v678
    %v689 = vpack.c.b16 %v681, %v680
    %698 = vmatprep.subr.bf16.mxu0 0
    %699 = vmatpush1.bf16.msra.mxu0 %v682
    %700 = vmatprep.subr.bf16.mxu0 0
    %701 = vmatpush1.bf16.msra.mxu0 %v683
    %702 = vmatprep.subr.bf16.mxu0 0
    %703 = vmatpush1.bf16.msra.mxu0 %v684
    %704 = vmatprep.subr.bf16.mxu0 0
    %705 = vmatpush1.bf16.msra.mxu0 %v685
    %706 = vmatprep.subr.bf16.mxu0 0
    %707 = vmatpush1.bf16.msra.mxu0 %v686
    %708 = vmatprep.subr.bf16.mxu0 0
    %709 = vmatpush1.bf16.msra.mxu0 %v687
    %710 = vmatprep.subr.bf16.mxu0 0
    %711 = vmatpush1.bf16.msra.mxu0 %v688
    %712 = vmatprep.subr.bf16.mxu0 0
    %713 = vmatpush1.bf16.msra.mxu0 %v689
    %714 = vmatprep.subr.bf16.mxu0 0
    %715 = vmatpush1.bf16.msra.mxu0 0
    %716 = vmatprep.subr.bf16.mxu0 0
    %717 = vmatpush1.bf16.msra.mxu0 0
    %718 = vmatprep.subr.bf16.mxu0 0
    %719 = vmatpush1.bf16.msra.mxu0 0
    %720 = vmatprep.subr.bf16.mxu0 0
    %721 = vmatpush1.bf16.msra.mxu0 0
    %722 = vmatprep.subr.bf16.mxu0 0
    %723 = vmatpush1.bf16.msra.mxu0 0
    %724 = vmatprep.subr.bf16.mxu0 0
    %725 = vmatpush1.bf16.msra.mxu0 0
    %726 = vmatprep.subr.bf16.mxu0 0
    %727 = vmatpush1.bf16.msra.mxu0 0
    %728 = vmatprep.subr.bf16.mxu0 0
    %729 = vmatpush1.bf16.msra.mxu0 0
    %730 = vmatprep.mubr.bf16.mxu0 0
    %731 = vmatmul.mubr.bf16.gmra.mrb[0].mxu0 %v619
    %v732 = vpop.f32.mrb[0].mxu0
    %v733 = vadd.f32 %v648, %v732
    %v734 = vpop.f32.mrb[0].mxu0
    %v735 = vpop.f32.mrb[0].mxu0
    %v736 = vadd.f32 %v648, %v735
    %v737 = vpop.f32.mrb[0].mxu0
    %738 = vmatprep.mubr.bf16.mxu0 0
    %739 = vmatmul.mubr.bf16.gmra.mrb[0].mxu0 %v620
    %v740 = vpop.f32.mrb[0].mxu0
    %v741 = vadd.f32 %v648, %v740
    %v742 = vpop.f32.mrb[0].mxu0
    %v743 = vpop.f32.mrb[0].mxu0
    %v744 = vadd.f32 %v648, %v743
    %v745 = vpop.f32.mrb[0].mxu0
    %746 = vmatprep.mubr.bf16.mxu0 0
    %747 = vmatmul.mubr.bf16.gmra.mrb[0].mxu0 %v621
    %v748 = vpop.f32.mrb[0].mxu0
    %v749 = vadd.f32 %v648, %v748
    %v750 = vpop.f32.mrb[0].mxu0
    %v751 = vpop.f32.mrb[0].mxu0
    %v752 = vadd.f32 %v648, %v751
    %v753 = vpop.f32.mrb[0].mxu0
    %754 = vmatprep.mubr.bf16.mxu0 0
    %755 = vmatmul.mubr.bf16.gmra.mrb[0].mxu0 %v622
    %v756 = vpop.f32.mrb[0].mxu0
    %v757 = vadd.f32 %v648, %v756
    %v758 = vpop.f32.mrb[0].mxu0
    %v759 = vpop.f32.mrb[0].mxu0
    %v760 = vadd.f32 %v648, %v759
    %v761 = vpop.f32.mrb[0].mxu0
    %762 = vmatprep.mubr.bf16.mxu0 0
    %763 = vmatmul.mubr.bf16.gmra.mrb[0].mxu0 %v623
    %v764 = vpop.f32.mrb[0].mxu0
    %v765 = vadd.f32 %v648, %v764
    %v766 = vpop.f32.mrb[0].mxu0
    %v767 = vpop.f32.mrb[0].mxu0
    %v768 = vadd.f32 %v648, %v767
    %v769 = vpop.f32.mrb[0].mxu0
    %770 = vmatprep.mubr.bf16.mxu0 0
    %771 = vmatmul.mubr.bf16.gmra.mrb[0].mxu0 %v624
    %v772 = vpop.f32.mrb[0].mxu0
    %v773 = vadd.f32 %v648, %v772
    %v774 = vpop.f32.mrb[0].mxu0
    %v775 = vpop.f32.mrb[0].mxu0
    %v776 = vadd.f32 %v648, %v775
    %v777 = vpop.f32.mrb[0].mxu0
    %778 = vmatprep.mubr.bf16.mxu0 0
    %779 = vmatmul.mubr.bf16.gmra.mrb[0].mxu0 %v625
    %v780 = vpop.f32.mrb[0].mxu0
    %v781 = vadd.f32 %v648, %v780
    %v782 = vpop.f32.mrb[0].mxu0
    %v783 = vpop.f32.mrb[0].mxu0
    %v784 = vadd.f32 %v648, %v783
    %v785 = vpop.f32.mrb[0].mxu0
    %786 = vmatprep.mubr.bf16.mxu0 0
    %787 = vmatmul.mubr.bf16.gmra.mrb[0].mxu0 %v626
    %v788 = vpop.f32.mrb[0].mxu0
    %v789 = vadd.f32 %v648, %v788
    %v790 = vpop.f32.mrb[0].mxu0
    %v791 = vpop.f32.mrb[0].mxu0
    %v792 = vadd.f32 %v648, %v791
    %v793 = vpop.f32.mrb[0].mxu0
    %794 = vdwg.mxu0
    %795 = vst [vmem:[#allocation12] sm:$0xff] %v733
    %796 = vst [vmem:[#allocation12 + $0x8] sm:$0xff] %v736
    %797 = vst [vmem:[#allocation12 + $0x10] sm:$0xff] %v741
    %798 = vst [vmem:[#allocation12 + $0x18] sm:$0xff] %v744
    %799 = vst [vmem:[#allocation12 + $0x20] sm:$0xff] %v749
    %800 = vst [vmem:[#allocation12 + $0x28] sm:$0xff] %v752
    %801 = vst [vmem:[#allocation12 + $0x30] sm:$0xff] %v757
    %802 = vst [vmem:[#allocation12 + $0x38] sm:$0xff] %v760
    %803 = vst [vmem:[#allocation12 + $0x40] sm:$0xff] %v765
    %804 = vst [vmem:[#allocation12 + $0x48] sm:$0xff] %v768
    %805 = vst [vmem:[#allocation12 + $0x50] sm:$0xff] %v773
    %806 = vst [vmem:[#allocation12 + $0x58] sm:$0xff] %v776
    %807 = vst [vmem:[#allocation12 + $0x60] sm:$0xff] %v781
    %808 = vst [vmem:[#allocation12 + $0x68] sm:$0xff] %v784
    %809 = vst [vmem:[#allocation12 + $0x70] sm:$0xff] %v789
    %810 = vst [vmem:[#allocation12 + $0x78] sm:$0xff] %v792
    // Predicated region
    $region46: #{tpu_custom_call.1} parent=1 // pred_check
      _
    $region47: #{tpu_custom_call.1} parent=1 // pred_check_branch
      %812 = sbr.rel (0) target = $region49
    $region48: #{tpu_custom_call.1} parent=1 // pred_region
      %s814 = ssub.s32 2048, 2048
      %815 = vsyncadd [#allocation6], %s814
      %s816 = sshll.u32 [#allocation12], 4
      %s817 = int_to_ptr.vmem [resolvable:$true] %s816
      %822 = dma.vmem_to_hbm [thread:$0]  %s817, 2048, %s7, [#allocation6], 128, 128, 8
    $region49: #{tpu_custom_call.1} parent=1 // pred_fallthru
      _
    // Predicated region
    $region50: #{tpu_custom_call.1} parent=1 // pred_check
      _
    $region51: #{tpu_custom_call.1} parent=1 // pred_check_branch
      %824 = sbr.rel (0) target = $region53
    $region52: #{tpu_custom_call.1} parent=1 // pred_region
      %825 = dma.done [#allocation6], 2048
    $region53: #{tpu_custom_call.1} parent=1 // pred_fallthru
      _
    %826 = vsyncpa [#allocation5], 1
    %827 = vsyncpa [#allocation8], 1
    %828 = vsyncpa [#allocation11], 1
    %829 = vsyncpa [#allocation6], 1

// kernel: tpu_custom_call.1
$region0: #{tpu_custom_call.1}
  #allocation0 [shape = 'u32[]', space=smem, size = 0x4, offset = 0x4, fixed_abs, tag = 'smem constant byte address 0x4 - core index']
  #allocation1 [shape = 'u32[144,128]{1,0:T(1,128)}', space=vmem, size = 0x12000, scoped, tag = 'internal scratch']
  #allocation2 [shape = 'bf16[128,128]{1,0:T(16,128)(2,1)}', space=vmem, size = 0x8000, scoped, tag = 'scratch operand']
  #allocation3 [shape = 'bf16[128,128]{1,0:T(16,128)(2,1)}', space=vmem, size = 0x8000, scoped, tag = 'scratch operand']
  %s0 = inlined_call_operand.hbm [shape: bf16[128,128], index: 0, kind: input, shape index: {}]
  %s1 = inlined_call_operand.hbm [shape: bf16[128,128], index: 1, kind: input, shape index: {}]
  %s2 = inlined_call_operand.vmem [shape: f32[1,128], index: 2, kind: input, shape index: {}]
  %s3 = inlined_call_operand.hbm [shape: bf16[128,128], index: 3, kind: input, shape index: {}]
  %s4 = inlined_call_operand.vmem [shape: f32[1,128], index: 4, kind: input, shape index: {}]
  %s5 = inlined_call_operand.hbm [shape: bf16[128,128], index: 5, kind: input, shape index: {}]
  %s6 = inlined_call_operand.vmem [shape: f32[1,128], index: 6, kind: input, shape index: {}]
  %s7 = inlined_call_operand.hbm [shape: f32[128,128], index: 7, kind: output, shape index: {}]
  %s8 = sld [smem:[#allocation0]]
  $region54: #{tpu_custom_call.1} parent=0
    _
  %s10 = ssub.s32 1, %s8
  %s11 = scalar_select 0, %s10, %s8
  $region1: #{tpu_custom_call.1} parent=0
    #allocation4 [shape = 'u8[32768]{0}', space=vmem, size = 0x8000, scoped, tag = 'input window, operand 0, single buffered']
    #allocation5 [shape = 's32[1]{0}', space=sflag, size = 0x4, scoped, tag = 'scoped memory for tpu_custom_call.1']
    #allocation6 [shape = 's32[1]{0}', space=sflag, size = 0x4, scoped, tag = 'scoped memory for tpu_custom_call.1']
    #allocation7 [shape = 'u8[32768]{0}', space=vmem, size = 0x8000, scoped, tag = 'input window, operand 1, single buffered']
    #allocation8 [shape = 's32[1]{0}', space=sflag, size = 0x4, scoped, tag = 'scoped memory for tpu_custom_call.1']
    #allocation9 [shape = 'u8[32768]{0}', space=vmem, size = 0x8000, scoped, tag = 'input window, operand 3, single buffered']
    #allocation10 [shape = 'u8[32768]{0}', space=vmem, size = 0x8000, scoped, tag = 'input window, operand 5, single buffered']
    #allocation11 [shape = 's32[1]{0}', space=sflag, size = 0x4, scoped, tag = 'scoped memory for tpu_custom_call.1']
    #allocation12 [shape = 'u8[65536]{0}', space=vmem, size = 0x10000, scoped, tag = 'output window, operand 0, single buffered']
    %12 = vsyncpa [#allocation5], 0
    %13 = vsyncpa [#allocation8], 0
    %14 = vsyncpa [#allocation11], 0
    %15 = vsyncpa [#allocation6], 0
    // Predicated region
    $region2: #{tpu_custom_call.1} parent=1 // pred_check
      _
    $region3: #{tpu_custom_call.1} parent=1 // pred_check_branch
      %17 = sbr.rel (0) target = $region5
    $region4: #{tpu_custom_call.1} parent=1 // pred_region
      %s19 = ssub.s32 1024, 1024
      %20 = vsyncadd [#allocation5], %s19
      %s21 = sshll.u32 [#allocation4], 4
      %s22 = int_to_ptr.vmem [resolvable:$true] %s21
      %27 = dma.hbm_to_vmem [thread:$0]  %s0, 1024, %s22, [#allocation5], 64, 64, 4
    $region5: #{tpu_custom_call.1} parent=1 // pred_fallthru
      _
    // Predicated region
    $region6: #{tpu_custom_call.1} parent=1 // pred_check
      _
    $region7: #{tpu_custom_call.1} parent=1 // pred_check_branch
      %29 = sbr.rel (0) target = $region9
    $region8: #{tpu_custom_call.1} parent=1 // pred_region
      %s31 = ssub.s32 1024, 1024
      %32 = vsyncadd [#allocation8], %s31
      %s33 = sshll.u32 [#allocation7], 4
      %s34 = int_to_ptr.vmem [resolvable:$true] %s33
      %39 = dma.hbm_to_vmem [thread:$0]  %s1, 1024, %s34, [#allocation8], 64, 64, 4
    $region9: #{tpu_custom_call.1} parent=1 // pred_fallthru
      _
    // Predicated region
    $region10: #{tpu_custom_call.1} parent=1 // pred_check
      _
    $region11: #{tpu_custom_call.1} parent=1 // pred_check_branch
      %41 = sbr.rel (0) target = $region13
    $region12: #{tpu_custom_call.1} parent=1 // pred_region
      _
    $region13: #{tpu_custom_call.1} parent=1 // pred_fallthru
      _
    // Predicated region
    $region14: #{tpu_custom_call.1} parent=1 // pred_check
      _
    $region15: #{tpu_custom_call.1} parent=1 // pred_check_branch
      %43 = sbr.rel (0) target = $region17
    $region16: #{tpu_custom_call.1} parent=1 // pred_region
      %s45 = ssub.s32 1024, 1024
      %46 = vsyncadd [#allocation8], %s45
      %s47 = sshll.u32 [#allocation9], 4
      %s48 = int_to_ptr.vmem [resolvable:$true] %s47
      %53 = dma.hbm_to_vmem [thread:$0]  %s3, 1024, %s48, [#allocation8], 64, 64, 4
    $region17: #{tpu_custom_call.1} parent=1 // pred_fallthru
      _
    // Predicated region
    $region18: #{tpu_custom_call.1} parent=1 // pred_check
      _
    $region19: #{tpu_custom_call.1} parent=1 // pred_check_branch
      %55 = sbr.rel (0) target = $region21
    $region20: #{tpu_custom_call.1} parent=1 // pred_region
      _
    $region21: #{tpu_custom_call.1} parent=1 // pred_fallthru
      _
    // Predicated region
    $region22: #{tpu_custom_call.1} parent=1 // pred_check
      _
    $region23: #{tpu_custom_call.1} parent=1 // pred_check_branch
      %57 = sbr.rel (0) target = $region25
    $region24: #{tpu_custom_call.1} parent=1 // pred_region
      %s59 = ssub.s32 1024, 1024
      %60 = vsyncadd [#allocation11], %s59
      %s61 = sshll.u32 [#allocation10], 4
      %s62 = int_to_ptr.vmem [resolvable:$true] %s61
      %67 = dma.hbm_to_vmem [thread:$0]  %s5, 1024, %s62, [#allocation11], 64, 64, 4
    $region25: #{tpu_custom_call.1} parent=1 // pred_fallthru
      _
    // Predicated region
    $region26: #{tpu_custom_call.1} parent=1 // pred_check
      _
    $region27: #{tpu_custom_call.1} parent=1 // pred_check_branch
      %69 = sbr.rel (0) target = $region29
    $region28: #{tpu_custom_call.1} parent=1 // pred_region
      _
    $region29: #{tpu_custom_call.1} parent=1 // pred_fallthru
      _
    // Predicated region
    $region30: #{tpu_custom_call.1} parent=1 // pred_check
      _
    $region31: #{tpu_custom_call.1} parent=1 // pred_check_branch
      %71 = sbr.rel (0) target = $region33
    $region32: #{tpu_custom_call.1} parent=1 // pred_region
      %72 = dma.done [#allocation5], 1024
    $region33: #{tpu_custom_call.1} parent=1 // pred_fallthru
      _
    // Predicated region
    $region34: #{tpu_custom_call.1} parent=1 // pred_check
      _
    $region35: #{tpu_custom_call.1} parent=1 // pred_check_branch
      %74 = sbr.rel (0) target = $region37
    $region36: #{tpu_custom_call.1} parent=1 // pred_region
      %75 = dma.done [#allocation8], 1024
    $region37: #{tpu_custom_call.1} parent=1 // pred_fallthru
      _
    // Predicated region
    $region38: #{tpu_custom_call.1} parent=1 // pred_check
      _
    $region39: #{tpu_custom_call.1} parent=1 // pred_check_branch
      %77 = sbr.rel (0) target = $region41
    $region40: #{tpu_custom_call.1} parent=1 // pred_region
      %78 = dma.done [#allocation8], 1024
    $region41: #{tpu_custom_call.1} parent=1 // pred_fallthru
      _
    // Predicated region
    $region42: #{tpu_custom_call.1} parent=1 // pred_check
      _
    $region43: #{tpu_custom_call.1} parent=1 // pred_check_branch
      %80 = sbr.rel (0) target = $region45
    $region44: #{tpu_custom_call.1} parent=1 // pred_region
      %81 = dma.done [#allocation11], 1024
    $region45: #{tpu_custom_call.1} parent=1 // pred_fallthru
      _
    %v83 = vld [vmem:[#allocation4] sm:$0xf]
    %v84 = vld [vmem:[#allocation4 + $0x4] sm:$0xf]
    %v85 = vld [vmem:[#allocation4 + $0x8] sm:$0xf]
    %v86 = vld [vmem:[#allocation4 + $0xc] sm:$0xf]
    %v87 = vld [vmem:[#allocation4 + $0x10] sm:$0xf]
    %v88 = vld [vmem:[#allocation4 + $0x14] sm:$0xf]
    %v89 = vld [vmem:[#allocation4 + $0x18] sm:$0xf]
    %v90 = vld [vmem:[#allocation4 + $0x1c] sm:$0xf]
    %v91 = vld [vmem:[#allocation4 + $0x20] sm:$0xf]
    %v92 = vld [vmem:[#allocation4 + $0x24] sm:$0xf]
    %v93 = vld [vmem:[#allocation4 + $0x28] sm:$0xf]
    %v94 = vld [vmem:[#allocation4 + $0x2c] sm:$0xf]
    %v95 = vld [vmem:[#allocation4 + $0x30] sm:$0xf]
    %v96 = vld [vmem:[#allocation4 + $0x34] sm:$0xf]
    %v97 = vld [vmem:[#allocation4 + $0x38] sm:$0xf]
    %v98 = vld [vmem:[#allocation4 + $0x3c] sm:$0xf]
    %v99 = vld [vmem:[#allocation7] sm:$0xf]
    %v100 = vld [vmem:[#allocation7 + $0x4] sm:$0xf]
    %v101 = vld [vmem:[#allocation7 + $0x8] sm:$0xf]
    %v102 = vld [vmem:[#allocation7 + $0xc] sm:$0xf]
    %v103 = vld [vmem:[#allocation7 + $0x10] sm:$0xf]
    %v104 = vld [vmem:[#allocation7 + $0x14] sm:$0xf]
    %v105 = vld [vmem:[#allocation7 + $0x18] sm:$0xf]
    %v106 = vld [vmem:[#allocation7 + $0x1c] sm:$0xf]
    %v107 = vld [vmem:[#allocation7 + $0x20] sm:$0xf]
    %v108 = vld [vmem:[#allocation7 + $0x24] sm:$0xf]
    %v109 = vld [vmem:[#allocation7 + $0x28] sm:$0xf]
    %v110 = vld [vmem:[#allocation7 + $0x2c] sm:$0xf]
    %v111 = vld [vmem:[#allocation7 + $0x30] sm:$0xf]
    %v112 = vld [vmem:[#allocation7 + $0x34] sm:$0xf]
    %v113 = vld [vmem:[#allocation7 + $0x38] sm:$0xf]
    %v114 = vld [vmem:[#allocation7 + $0x3c] sm:$0xf]
    %v115 = vld [vmem:[%s2] sm:$0x1]
    %v117 = vlaneseq
    %v118 = vshrl.u32 %v117, 7
    %v119 = vsub.s32 0, %v118
    %v120 = vrot.slane %v115, %v119
    %v138 = vunpack.c.l.b16 %v83
    %v139 = vunpack.c.l.b16 %v84
    %v140 = vunpack.c.l.b16 %v85
    %v141 = vunpack.c.l.b16 %v86
    %v142 = vunpack.c.l.b16 %v87
    %v143 = vunpack.c.l.b16 %v88
    %v144 = vunpack.c.l.b16 %v89
    %v145 = vunpack.c.l.b16 %v90
    %v146 = vunpack.c.l.b16 %v91
    %v147 = vunpack.c.l.b16 %v92
    %v148 = vunpack.c.l.b16 %v93
    %v149 = vunpack.c.l.b16 %v94
    %v150 = vunpack.c.l.b16 %v95
    %v151 = vunpack.c.l.b16 %v96
    %v152 = vunpack.c.l.b16 %v97
    %v153 = vunpack.c.l.b16 %v98
    %v154 = vpack.c.b16 %v139, %v138
    %v155 = vpack.c.b16 %v141, %v140
    %v156 = vpack.c.b16 %v143, %v142
    %v157 = vpack.c.b16 %v145, %v144
    %v158 = vpack.c.b16 %v147, %v146
    %v159 = vpack.c.b16 %v149, %v148
    %v160 = vpack.c.b16 %v151, %v150
    %v161 = vpack.c.b16 %v153, %v152
    %v186 = vunpack.c.l.b16 %v99
    %v187 = vunpack.c.l.b16 %v100
    %v188 = vunpack.c.l.b16 %v101
    %v189 = vunpack.c.l.b16 %v102
    %v190 = vunpack.c.l.b16 %v103
    %v191 = vunpack.c.l.b16 %v104
    %v192 = vunpack.c.l.b16 %v105
    %v193 = vunpack.c.l.b16 %v106
    %v194 = vunpack.c.l.b16 %v107
    %v195 = vunpack.c.l.b16 %v108
    %v196 = vunpack.c.l.b16 %v109
    %v197 = vunpack.c.l.b16 %v110
    %v198 = vunpack.c.l.b16 %v111
    %v199 = vunpack.c.l.b16 %v112
    %v200 = vunpack.c.l.b16 %v113
    %v201 = vunpack.c.l.b16 %v114
    %v202 = vpack.c.b16 %v187, %v186
    %v203 = vpack.c.b16 %v189, %v188
    %v204 = vpack.c.b16 %v191, %v190
    %v205 = vpack.c.b16 %v193, %v192
    %v206 = vpack.c.b16 %v195, %v194
    %v207 = vpack.c.b16 %v197, %v196
    %v208 = vpack.c.b16 %v199, %v198
    %v209 = vpack.c.b16 %v201, %v200
    %218 = vmatprep.subr.bf16.mxu0 0
    %219 = vmatpush1.bf16.msra.mxu0 %v202
    %220 = vmatprep.subr.bf16.mxu0 0
    %221 = vmatpush1.bf16.msra.mxu0 %v203
    %222 = vmatprep.subr.bf16.mxu0 0
    %223 = vmatpush1.bf16.msra.mxu0 %v204
    %224 = vmatprep.subr.bf16.mxu0 0
    %225 = vmatpush1.bf16.msra.mxu0 %v205
    %226 = vmatprep.subr.bf16.mxu0 0
    %227 = vmatpush1.bf16.msra.mxu0 %v206
    %228 = vmatprep.subr.bf16.mxu0 0
    %229 = vmatpush1.bf16.msra.mxu0 %v207
    %230 = vmatprep.subr.bf16.mxu0 0
    %231 = vmatpush1.bf16.msra.mxu0 %v208
    %232 = vmatprep.subr.bf16.mxu0 0
    %233 = vmatpush1.bf16.msra.mxu0 %v209
    %234 = vmatprep.subr.bf16.mxu0 0
    %235 = vmatpush1.bf16.msra.mxu0 0
    %236 = vmatprep.subr.bf16.mxu0 0
    %237 = vmatpush1.bf16.msra.mxu0 0
    %238 = vmatprep.subr.bf16.mxu0 0
    %239 = vmatpush1.bf16.msra.mxu0 0
    %240 = vmatprep.subr.bf16.mxu0 0
    %241 = vmatpush1.bf16.msra.mxu0 0
    %242 = vmatprep.subr.bf16.mxu0 0
    %243 = vmatpush1.bf16.msra.mxu0 0
    %244 = vmatprep.subr.bf16.mxu0 0
    %245 = vmatpush1.bf16.msra.mxu0 0
    %246 = vmatprep.subr.bf16.mxu0 0
    %247 = vmatpush1.bf16.msra.mxu0 0
    %248 = vmatprep.subr.bf16.mxu0 0
    %249 = vmatpush1.bf16.msra.mxu0 0
    %250 = vmatprep.mubr.bf16.mxu0 0
    %251 = vmatmul.mubr.bf16.gmra.mrb[0].mxu0 %v154
    %v252 = vpop.f32.mrb[0].mxu0
    %v253 = vadd.f32 %v120, %v252
    %v254 = vpop.f32.mrb[0].mxu0
    %v255 = vpop.f32.mrb[0].mxu0
    %v256 = vadd.f32 %v120, %v255
    %v257 = vpop.f32.mrb[0].mxu0
    %258 = vmatprep.mubr.bf16.mxu0 0
    %259 = vmatmul.mubr.bf16.gmra.mrb[0].mxu0 %v155
    %v260 = vpop.f32.mrb[0].mxu0
    %v261 = vadd.f32 %v120, %v260
    %v262 = vpop.f32.mrb[0].mxu0
    %v263 = vpop.f32.mrb[0].mxu0
    %v264 = vadd.f32 %v120, %v263
    %v265 = vpop.f32.mrb[0].mxu0
    %266 = vmatprep.mubr.bf16.mxu0 0
    %267 = vmatmul.mubr.bf16.gmra.mrb[0].mxu0 %v156
    %v268 = vpop.f32.mrb[0].mxu0
    %v269 = vadd.f32 %v120, %v268
    %v270 = vpop.f32.mrb[0].mxu0
    %v271 = vpop.f32.mrb[0].mxu0
    %v272 = vadd.f32 %v120, %v271
    %v273 = vpop.f32.mrb[0].mxu0
    %274 = vmatprep.mubr.bf16.mxu0 0
    %275 = vmatmul.mubr.bf16.gmra.mrb[0].mxu0 %v157
    %v276 = vpop.f32.mrb[0].mxu0
    %v277 = vadd.f32 %v120, %v276
    %v278 = vpop.f32.mrb[0].mxu0
    %v279 = vpop.f32.mrb[0].mxu0
    %v280 = vadd.f32 %v120, %v279
    %v281 = vpop.f32.mrb[0].mxu0
    %282 = vmatprep.mubr.bf16.mxu0 0
    %283 = vmatmul.mubr.bf16.gmra.mrb[0].mxu0 %v158
    %v284 = vpop.f32.mrb[0].mxu0
    %v285 = vadd.f32 %v120, %v284
    %v286 = vpop.f32.mrb[0].mxu0
    %v287 = vpop.f32.mrb[0].mxu0
    %v288 = vadd.f32 %v120, %v287
    %v289 = vpop.f32.mrb[0].mxu0
    %290 = vmatprep.mubr.bf16.mxu0 0
    %291 = vmatmul.mubr.bf16.gmra.mrb[0].mxu0 %v159
    %v292 = vpop.f32.mrb[0].mxu0
    %v293 = vadd.f32 %v120, %v292
    %v294 = vpop.f32.mrb[0].mxu0
    %v295 = vpop.f32.mrb[0].mxu0
    %v296 = vadd.f32 %v120, %v295
    %v297 = vpop.f32.mrb[0].mxu0
    %298 = vmatprep.mubr.bf16.mxu0 0
    %299 = vmatmul.mubr.bf16.gmra.mrb[0].mxu0 %v160
    %v300 = vpop.f32.mrb[0].mxu0
    %v301 = vadd.f32 %v120, %v300
    %v302 = vpop.f32.mrb[0].mxu0
    %v303 = vpop.f32.mrb[0].mxu0
    %v304 = vadd.f32 %v120, %v303
    %v305 = vpop.f32.mrb[0].mxu0
    %306 = vmatprep.mubr.bf16.mxu0 0
    %307 = vmatmul.mubr.bf16.gmra.mrb[0].mxu0 %v161
    %v308 = vpop.f32.mrb[0].mxu0
    %v309 = vadd.f32 %v120, %v308
    %v310 = vpop.f32.mrb[0].mxu0
    %v311 = vpop.f32.mrb[0].mxu0
    %v312 = vadd.f32 %v120, %v311
    %v313 = vpop.f32.mrb[0].mxu0
    %314 = vdwg.mxu0
    %vm315 = vcmp.ge.f32.partialorder %v253, 0.0
    %vm316 = vcmp.ge.f32.partialorder %v256, 0.0
    %vm317 = vcmp.ge.f32.partialorder %v261, 0.0
    %vm318 = vcmp.ge.f32.partialorder %v264, 0.0
    %vm319 = vcmp.ge.f32.partialorder %v269, 0.0
    %vm320 = vcmp.ge.f32.partialorder %v272, 0.0
    %vm321 = vcmp.ge.f32.partialorder %v277, 0.0
    %vm322 = vcmp.ge.f32.partialorder %v280, 0.0
    %vm323 = vcmp.ge.f32.partialorder %v285, 0.0
    %vm324 = vcmp.ge.f32.partialorder %v288, 0.0
    %vm325 = vcmp.ge.f32.partialorder %v293, 0.0
    %vm326 = vcmp.ge.f32.partialorder %v296, 0.0
    %vm327 = vcmp.ge.f32.partialorder %v301, 0.0
    %vm328 = vcmp.ge.f32.partialorder %v304, 0.0
    %vm329 = vcmp.ge.f32.partialorder %v309, 0.0
    %vm330 = vcmp.ge.f32.partialorder %v312, 0.0
    %v331 = vmul.f32 %v253, 0.2
    %v332 = vmul.f32 %v256, 0.2
    %v333 = vmul.f32 %v261, 0.2
    %v334 = vmul.f32 %v264, 0.2
    %v335 = vmul.f32 %v269, 0.2
    %v336 = vmul.f32 %v272, 0.2
    %v337 = vmul.f32 %v277, 0.2
    %v338 = vmul.f32 %v280, 0.2
    %v339 = vmul.f32 %v285, 0.2
    %v340 = vmul.f32 %v288, 0.2
    %v341 = vmul.f32 %v293, 0.2
    %v342 = vmul.f32 %v296, 0.2
    %v343 = vmul.f32 %v301, 0.2
    %v344 = vmul.f32 %v304, 0.2
    %v345 = vmul.f32 %v309, 0.2
    %v346 = vmul.f32 %v312, 0.2
    %v347 = vsel %vm315, %v253, %v331
    %v348 = vsel %vm316, %v256, %v332
    %v349 = vsel %vm317, %v261, %v333
    %v350 = vsel %vm318, %v264, %v334
    %v351 = vsel %vm319, %v269, %v335
    %v352 = vsel %vm320, %v272, %v336
    %v353 = vsel %vm321, %v277, %v337
    %v354 = vsel %vm322, %v280, %v338
    %v355 = vsel %vm323, %v285, %v339
    %v356 = vsel %vm324, %v288, %v340
    %v357 = vsel %vm325, %v293, %v341
    %v358 = vsel %vm326, %v296, %v342
    %v359 = vsel %vm327, %v301, %v343
    %v360 = vsel %vm328, %v304, %v344
    %v361 = vsel %vm329, %v309, %v345
    %v362 = vsel %vm330, %v312, %v346
    %v363 = vpack.c.bf16 %v348, %v347
    %v364 = vpack.c.bf16 %v350, %v349
    %v365 = vpack.c.bf16 %v352, %v351
    %v366 = vpack.c.bf16 %v354, %v353
    %v367 = vpack.c.bf16 %v356, %v355
    %v368 = vpack.c.bf16 %v358, %v357
    %v369 = vpack.c.bf16 %v360, %v359
    %v370 = vpack.c.bf16 %v362, %v361
    %371 = vst [vmem:[#allocation2] sm:$0xff] %v363
    %372 = vst [vmem:[#allocation2 + $0x8] sm:$0xff] %v364
    %373 = vst [vmem:[#allocation2 + $0x10] sm:$0xff] %v365
    %374 = vst [vmem:[#allocation2 + $0x18] sm:$0xff] %v366
    %375 = vst [vmem:[#allocation2 + $0x20] sm:$0xff] %v367
    %376 = vst [vmem:[#allocation2 + $0x28] sm:$0xff] %v368
    %377 = vst [vmem:[#allocation2 + $0x30] sm:$0xff] %v369
    %378 = vst [vmem:[#allocation2 + $0x38] sm:$0xff] %v370
    %v379 = vld [vmem:[#allocation2] sm:$0xff]
    %v380 = vld [vmem:[#allocation2 + $0x8] sm:$0xff]
    %v381 = vld [vmem:[#allocation2 + $0x10] sm:$0xff]
    %v382 = vld [vmem:[#allocation2 + $0x18] sm:$0xff]
    %v383 = vld [vmem:[#allocation2 + $0x20] sm:$0xff]
    %v384 = vld [vmem:[#allocation2 + $0x28] sm:$0xff]
    %v385 = vld [vmem:[#allocation2 + $0x30] sm:$0xff]
    %v386 = vld [vmem:[#allocation2 + $0x38] sm:$0xff]
    %v387 = vld [vmem:[#allocation9] sm:$0xf]
    %v388 = vld [vmem:[#allocation9 + $0x4] sm:$0xf]
    %v389 = vld [vmem:[#allocation9 + $0x8] sm:$0xf]
    %v390 = vld [vmem:[#allocation9 + $0xc] sm:$0xf]
    %v391 = vld [vmem:[#allocation9 + $0x10] sm:$0xf]
    %v392 = vld [vmem:[#allocation9 + $0x14] sm:$0xf]
    %v393 = vld [vmem:[#allocation9 + $0x18] sm:$0xf]
    %v394 = vld [vmem:[#allocation9 + $0x1c] sm:$0xf]
    %v395 = vld [vmem:[#allocation9 + $0x20] sm:$0xf]
    %v396 = vld [vmem:[#allocation9 + $0x24] sm:$0xf]
    %v397 = vld [vmem:[#allocation9 + $0x28] sm:$0xf]
    %v398 = vld [vmem:[#allocation9 + $0x2c] sm:$0xf]
    %v399 = vld [vmem:[#allocation9 + $0x30] sm:$0xf]
    %v400 = vld [vmem:[#allocation9 + $0x34] sm:$0xf]
    %v401 = vld [vmem:[#allocation9 + $0x38] sm:$0xf]
    %v402 = vld [vmem:[#allocation9 + $0x3c] sm:$0xf]
    %v403 = vld [vmem:[%s4] sm:$0x1]
    %v405 = vlaneseq
    %v406 = vshrl.u32 %v405, 7
    %v407 = vsub.s32 0, %v406
    %v408 = vrot.slane %v403, %v407
    %v426 = vunpack.c.l.b16 %v387
    %v427 = vunpack.c.l.b16 %v388
    %v428 = vunpack.c.l.b16 %v389
    %v429 = vunpack.c.l.b16 %v390
    %v430 = vunpack.c.l.b16 %v391
    %v431 = vunpack.c.l.b16 %v392
    %v432 = vunpack.c.l.b16 %v393
    %v433 = vunpack.c.l.b16 %v394
    %v434 = vunpack.c.l.b16 %v395
    %v435 = vunpack.c.l.b16 %v396
    %v436 = vunpack.c.l.b16 %v397
    %v437 = vunpack.c.l.b16 %v398
    %v438 = vunpack.c.l.b16 %v399
    %v439 = vunpack.c.l.b16 %v400
    %v440 = vunpack.c.l.b16 %v401
    %v441 = vunpack.c.l.b16 %v402
    %v442 = vpack.c.b16 %v427, %v426
    %v443 = vpack.c.b16 %v429, %v428
    %v444 = vpack.c.b16 %v431, %v430
    %v445 = vpack.c.b16 %v433, %v432
    %v446 = vpack.c.b16 %v435, %v434
    %v447 = vpack.c.b16 %v437, %v436
    %v448 = vpack.c.b16 %v439, %v438
    %v449 = vpack.c.b16 %v441, %v440
    %458 = vmatprep.subr.bf16.mxu0 0
    %459 = vmatpush1.bf16.msra.mxu0 %v442
    %460 = vmatprep.subr.bf16.mxu0 0
    %461 = vmatpush1.bf16.msra.mxu0 %v443
    %462 = vmatprep.subr.bf16.mxu0 0
    %463 = vmatpush1.bf16.msra.mxu0 %v444
    %464 = vmatprep.subr.bf16.mxu0 0
    %465 = vmatpush1.bf16.msra.mxu0 %v445
    %466 = vmatprep.subr.bf16.mxu0 0
    %467 = vmatpush1.bf16.msra.mxu0 %v446
    %468 = vmatprep.subr.bf16.mxu0 0
    %469 = vmatpush1.bf16.msra.mxu0 %v447
    %470 = vmatprep.subr.bf16.mxu0 0
    %471 = vmatpush1.bf16.msra.mxu0 %v448
    %472 = vmatprep.subr.bf16.mxu0 0
    %473 = vmatpush1.bf16.msra.mxu0 %v449
    %474 = vmatprep.subr.bf16.mxu0 0
    %475 = vmatpush1.bf16.msra.mxu0 0
    %476 = vmatprep.subr.bf16.mxu0 0
    %477 = vmatpush1.bf16.msra.mxu0 0
    %478 = vmatprep.subr.bf16.mxu0 0
    %479 = vmatpush1.bf16.msra.mxu0 0
    %480 = vmatprep.subr.bf16.mxu0 0
    %481 = vmatpush1.bf16.msra.mxu0 0
    %482 = vmatprep.subr.bf16.mxu0 0
    %483 = vmatpush1.bf16.msra.mxu0 0
    %484 = vmatprep.subr.bf16.mxu0 0
    %485 = vmatpush1.bf16.msra.mxu0 0
    %486 = vmatprep.subr.bf16.mxu0 0
    %487 = vmatpush1.bf16.msra.mxu0 0
    %488 = vmatprep.subr.bf16.mxu0 0
    %489 = vmatpush1.bf16.msra.mxu0 0
    %490 = vmatprep.mubr.bf16.mxu0 0
    %491 = vmatmul.mubr.bf16.gmra.mrb[0].mxu0 %v379
    %v492 = vpop.f32.mrb[0].mxu0
    %v493 = vadd.f32 %v408, %v492
    %v494 = vpop.f32.mrb[0].mxu0
    %v495 = vpop.f32.mrb[0].mxu0
    %v496 = vadd.f32 %v408, %v495
    %v497 = vpop.f32.mrb[0].mxu0
    %498 = vmatprep.mubr.bf16.mxu0 0
    %499 = vmatmul.mubr.bf16.gmra.mrb[0].mxu0 %v380
    %v500 = vpop.f32.mrb[0].mxu0
    %v501 = vadd.f32 %v408, %v500
    %v502 = vpop.f32.mrb[0].mxu0
    %v503 = vpop.f32.mrb[0].mxu0
    %v504 = vadd.f32 %v408, %v503
    %v505 = vpop.f32.mrb[0].mxu0
    %506 = vmatprep.mubr.bf16.mxu0 0
    %507 = vmatmul.mubr.bf16.gmra.mrb[0].mxu0 %v381
    %v508 = vpop.f32.mrb[0].mxu0
    %v509 = vadd.f32 %v408, %v508
    %v510 = vpop.f32.mrb[0].mxu0
    %v511 = vpop.f32.mrb[0].mxu0
    %v512 = vadd.f32 %v408, %v511
    %v513 = vpop.f32.mrb[0].mxu0
    %514 = vmatprep.mubr.bf16.mxu0 0
    %515 = vmatmul.mubr.bf16.gmra.mrb[0].mxu0 %v382
    %v516 = vpop.f32.mrb[0].mxu0
    %v517 = vadd.f32 %v408, %v516
    %v518 = vpop.f32.mrb[0].mxu0
    %v519 = vpop.f32.mrb[0].mxu0
    %v520 = vadd.f32 %v408, %v519
    %v521 = vpop.f32.mrb[0].mxu0
    %522 = vmatprep.mubr.bf16.mxu0 0
    %523 = vmatmul.mubr.bf16.gmra.mrb[0].mxu0 %v383
    %v524 = vpop.f32.mrb[0].mxu0
    %v525 = vadd.f32 %v408, %v524
    %v526 = vpop.f32.mrb[0].mxu0
    %v527 = vpop.f32.mrb[0].mxu0
    %v528 = vadd.f32 %v408, %v527
    %v529 = vpop.f32.mrb[0].mxu0
    %530 = vmatprep.mubr.bf16.mxu0 0
    %531 = vmatmul.mubr.bf16.gmra.mrb[0].mxu0 %v384
    %v532 = vpop.f32.mrb[0].mxu0
    %v533 = vadd.f32 %v408, %v532
    %v534 = vpop.f32.mrb[0].mxu0
    %v535 = vpop.f32.mrb[0].mxu0
    %v536 = vadd.f32 %v408, %v535
    %v537 = vpop.f32.mrb[0].mxu0
    %538 = vmatprep.mubr.bf16.mxu0 0
    %539 = vmatmul.mubr.bf16.gmra.mrb[0].mxu0 %v385
    %v540 = vpop.f32.mrb[0].mxu0
    %v541 = vadd.f32 %v408, %v540
    %v542 = vpop.f32.mrb[0].mxu0
    %v543 = vpop.f32.mrb[0].mxu0
    %v544 = vadd.f32 %v408, %v543
    %v545 = vpop.f32.mrb[0].mxu0
    %546 = vmatprep.mubr.bf16.mxu0 0
    %547 = vmatmul.mubr.bf16.gmra.mrb[0].mxu0 %v386
    %v548 = vpop.f32.mrb[0].mxu0
    %v549 = vadd.f32 %v408, %v548
    %v550 = vpop.f32.mrb[0].mxu0
    %v551 = vpop.f32.mrb[0].mxu0
    %v552 = vadd.f32 %v408, %v551
    %v553 = vpop.f32.mrb[0].mxu0
    %554 = vdwg.mxu0
    %vm555 = vcmp.ge.f32.partialorder %v493, 0.0
    %vm556 = vcmp.ge.f32.partialorder %v496, 0.0
    %vm557 = vcmp.ge.f32.partialorder %v501, 0.0
    %vm558 = vcmp.ge.f32.partialorder %v504, 0.0
    %vm559 = vcmp.ge.f32.partialorder %v509, 0.0
    %vm560 = vcmp.ge.f32.partialorder %v512, 0.0
    %vm561 = vcmp.ge.f32.partialorder %v517, 0.0
    %vm562 = vcmp.ge.f32.partialorder %v520, 0.0
    %vm563 = vcmp.ge.f32.partialorder %v525, 0.0
    %vm564 = vcmp.ge.f32.partialorder %v528, 0.0
    %vm565 = vcmp.ge.f32.partialorder %v533, 0.0
    %vm566 = vcmp.ge.f32.partialorder %v536, 0.0
    %vm567 = vcmp.ge.f32.partialorder %v541, 0.0
    %vm568 = vcmp.ge.f32.partialorder %v544, 0.0
    %vm569 = vcmp.ge.f32.partialorder %v549, 0.0
    %vm570 = vcmp.ge.f32.partialorder %v552, 0.0
    %v571 = vmul.f32 %v493, 0.2
    %v572 = vmul.f32 %v496, 0.2
    %v573 = vmul.f32 %v501, 0.2
    %v574 = vmul.f32 %v504, 0.2
    %v575 = vmul.f32 %v509, 0.2
    %v576 = vmul.f32 %v512, 0.2
    %v577 = vmul.f32 %v517, 0.2
    %v578 = vmul.f32 %v520, 0.2
    %v579 = vmul.f32 %v525, 0.2
    %v580 = vmul.f32 %v528, 0.2
    %v581 = vmul.f32 %v533, 0.2
    %v582 = vmul.f32 %v536, 0.2
    %v583 = vmul.f32 %v541, 0.2
    %v584 = vmul.f32 %v544, 0.2
    %v585 = vmul.f32 %v549, 0.2
    %v586 = vmul.f32 %v552, 0.2
    %v587 = vsel %vm555, %v493, %v571
    %v588 = vsel %vm556, %v496, %v572
    %v589 = vsel %vm557, %v501, %v573
    %v590 = vsel %vm558, %v504, %v574
    %v591 = vsel %vm559, %v509, %v575
    %v592 = vsel %vm560, %v512, %v576
    %v593 = vsel %vm561, %v517, %v577
    %v594 = vsel %vm562, %v520, %v578
    %v595 = vsel %vm563, %v525, %v579
    %v596 = vsel %vm564, %v528, %v580
    %v597 = vsel %vm565, %v533, %v581
    %v598 = vsel %vm566, %v536, %v582
    %v599 = vsel %vm567, %v541, %v583
    %v600 = vsel %vm568, %v544, %v584
    %v601 = vsel %vm569, %v549, %v585
    %v602 = vsel %vm570, %v552, %v586
    %v603 = vpack.c.bf16 %v588, %v587
    %v604 = vpack.c.bf16 %v590, %v589
    %v605 = vpack.c.bf16 %v592, %v591
    %v606 = vpack.c.bf16 %v594, %v593
    %v607 = vpack.c.bf16 %v596, %v595
    %v608 = vpack.c.bf16 %v598, %v597
    %v609 = vpack.c.bf16 %v600, %v599
    %v610 = vpack.c.bf16 %v602, %v601
    %611 = vst [vmem:[#allocation3] sm:$0xff] %v603
    %612 = vst [vmem:[#allocation3 + $0x8] sm:$0xff] %v604
    %613 = vst [vmem:[#allocation3 + $0x10] sm:$0xff] %v605
    %614 = vst [vmem:[#allocation3 + $0x18] sm:$0xff] %v606
    %615 = vst [vmem:[#allocation3 + $0x20] sm:$0xff] %v607
    %616 = vst [vmem:[#allocation3 + $0x28] sm:$0xff] %v608
    %617 = vst [vmem:[#allocation3 + $0x30] sm:$0xff] %v609
    %618 = vst [vmem:[#allocation3 + $0x38] sm:$0xff] %v610
    %v619 = vld [vmem:[#allocation3] sm:$0xff]
    %v620 = vld [vmem:[#allocation3 + $0x8] sm:$0xff]
    %v621 = vld [vmem:[#allocation3 + $0x10] sm:$0xff]
    %v622 = vld [vmem:[#allocation3 + $0x18] sm:$0xff]
    %v623 = vld [vmem:[#allocation3 + $0x20] sm:$0xff]
    %v624 = vld [vmem:[#allocation3 + $0x28] sm:$0xff]
    %v625 = vld [vmem:[#allocation3 + $0x30] sm:$0xff]
    %v626 = vld [vmem:[#allocation3 + $0x38] sm:$0xff]
    %v627 = vld [vmem:[#allocation10] sm:$0xf]
    %v628 = vld [vmem:[#allocation10 + $0x4] sm:$0xf]
    %v629 = vld [vmem:[#allocation10 + $0x8] sm:$0xf]
    %v630 = vld [vmem:[#allocation10 + $0xc] sm:$0xf]
    %v631 = vld [vmem:[#allocation10 + $0x10] sm:$0xf]
    %v632 = vld [vmem:[#allocation10 + $0x14] sm:$0xf]
    %v633 = vld [vmem:[#allocation10 + $0x18] sm:$0xf]
    %v634 = vld [vmem:[#allocation10 + $0x1c] sm:$0xf]
    %v635 = vld [vmem:[#allocation10 + $0x20] sm:$0xf]
    %v636 = vld [vmem:[#allocation10 + $0x24] sm:$0xf]
    %v637 = vld [vmem:[#allocation10 + $0x28] sm:$0xf]
    %v638 = vld [vmem:[#allocation10 + $0x2c] sm:$0xf]
    %v639 = vld [vmem:[#allocation10 + $0x30] sm:$0xf]
    %v640 = vld [vmem:[#allocation10 + $0x34] sm:$0xf]
    %v641 = vld [vmem:[#allocation10 + $0x38] sm:$0xf]
    %v642 = vld [vmem:[#allocation10 + $0x3c] sm:$0xf]
    %v643 = vld [vmem:[%s6] sm:$0x1]
    %v645 = vlaneseq
    %v646 = vshrl.u32 %v645, 7
    %v647 = vsub.s32 0, %v646
    %v648 = vrot.slane %v643, %v647
    %v666 = vunpack.c.l.b16 %v627
    %v667 = vunpack.c.l.b16 %v628
    %v668 = vunpack.c.l.b16 %v629
    %v669 = vunpack.c.l.b16 %v630
    %v670 = vunpack.c.l.b16 %v631
    %v671 = vunpack.c.l.b16 %v632
    %v672 = vunpack.c.l.b16 %v633
    %v673 = vunpack.c.l.b16 %v634
    %v674 = vunpack.c.l.b16 %v635
    %v675 = vunpack.c.l.b16 %v636
    %v676 = vunpack.c.l.b16 %v637
    %v677 = vunpack.c.l.b16 %v638
    %v678 = vunpack.c.l.b16 %v639
    %v679 = vunpack.c.l.b16 %v640
    %v680 = vunpack.c.l.b16 %v641
    %v681 = vunpack.c.l.b16 %v642
    %v682 = vpack.c.b16 %v667, %v666
    %v683 = vpack.c.b16 %v669, %v668
    %v684 = vpack.c.b16 %v671, %v670
    %v685 = vpack.c.b16 %v673, %v672
    %v686 = vpack.c.b16 %v675, %v674
    %v687 = vpack.c.b16 %v677, %v676
    %v688 = vpack.c.b16 %v679, %v678
    %v689 = vpack.c.b16 %v681, %v680
    %698 = vmatprep.subr.bf16.mxu0 0
    %699 = vmatpush1.bf16.msra.mxu0 %v682
    %700 = vmatprep.subr.bf16.mxu0 0
    %701 = vmatpush1.bf16.msra.mxu0 %v683
    %702 = vmatprep.subr.bf16.mxu0 0
    %703 = vmatpush1.bf16.msra.mxu0 %v684
    %704 = vmatprep.subr.bf16.mxu0 0
    %705 = vmatpush1.bf16.msra.mxu0 %v685
    %706 = vmatprep.subr.bf16.mxu0 0
    %707 = vmatpush1.bf16.msra.mxu0 %v686
    %708 = vmatprep.subr.bf16.mxu0 0
    %709 = vmatpush1.bf16.msra.mxu0 %v687
    %710 = vmatprep.subr.bf16.mxu0 0
    %711 = vmatpush1.bf16.msra.mxu0 %v688
    %712 = vmatprep.subr.bf16.mxu0 0
    %713 = vmatpush1.bf16.msra.mxu0 %v689
    %714 = vmatprep.subr.bf16.mxu0 0
    %715 = vmatpush1.bf16.msra.mxu0 0
    %716 = vmatprep.subr.bf16.mxu0 0
    %717 = vmatpush1.bf16.msra.mxu0 0
    %718 = vmatprep.subr.bf16.mxu0 0
    %719 = vmatpush1.bf16.msra.mxu0 0
    %720 = vmatprep.subr.bf16.mxu0 0
    %721 = vmatpush1.bf16.msra.mxu0 0
    %722 = vmatprep.subr.bf16.mxu0 0
    %723 = vmatpush1.bf16.msra.mxu0 0
    %724 = vmatprep.subr.bf16.mxu0 0
    %725 = vmatpush1.bf16.msra.mxu0 0
    %726 = vmatprep.subr.bf16.mxu0 0
    %727 = vmatpush1.bf16.msra.mxu0 0
    %728 = vmatprep.subr.bf16.mxu0 0
    %729 = vmatpush1.bf16.msra.mxu0 0
    %730 = vmatprep.mubr.bf16.mxu0 0
    %731 = vmatmul.mubr.bf16.gmra.mrb[0].mxu0 %v619
    %v732 = vpop.f32.mrb[0].mxu0
    %v733 = vadd.f32 %v648, %v732
    %v734 = vpop.f32.mrb[0].mxu0
    %v735 = vpop.f32.mrb[0].mxu0
    %v736 = vadd.f32 %v648, %v735
    %v737 = vpop.f32.mrb[0].mxu0
    %738 = vmatprep.mubr.bf16.mxu0 0
    %739 = vmatmul.mubr.bf16.gmra.mrb[0].mxu0 %v620
    %v740 = vpop.f32.mrb[0].mxu0
    %v741 = vadd.f32 %v648, %v740
    %v742 = vpop.f32.mrb[0].mxu0
    %v743 = vpop.f32.mrb[0].mxu0
    %v744 = vadd.f32 %v648, %v743
    %v745 = vpop.f32.mrb[0].mxu0
    %746 = vmatprep.mubr.bf16.mxu0 0
    %747 = vmatmul.mubr.bf16.gmra.mrb[0].mxu0 %v621
    %v748 = vpop.f32.mrb[0].mxu0
    %v749 = vadd.f32 %v648, %v748
    %v750 = vpop.f32.mrb[0].mxu0
    %v751 = vpop.f32.mrb[0].mxu0
    %v752 = vadd.f32 %v648, %v751
    %v753 = vpop.f32.mrb[0].mxu0
    %754 = vmatprep.mubr.bf16.mxu0 0
    %755 = vmatmul.mubr.bf16.gmra.mrb[0].mxu0 %v622
    %v756 = vpop.f32.mrb[0].mxu0
    %v757 = vadd.f32 %v648, %v756
    %v758 = vpop.f32.mrb[0].mxu0
    %v759 = vpop.f32.mrb[0].mxu0
    %v760 = vadd.f32 %v648, %v759
    %v761 = vpop.f32.mrb[0].mxu0
    %762 = vmatprep.mubr.bf16.mxu0 0
    %763 = vmatmul.mubr.bf16.gmra.mrb[0].mxu0 %v623
    %v764 = vpop.f32.mrb[0].mxu0
    %v765 = vadd.f32 %v648, %v764
    %v766 = vpop.f32.mrb[0].mxu0
    %v767 = vpop.f32.mrb[0].mxu0
    %v768 = vadd.f32 %v648, %v767
    %v769 = vpop.f32.mrb[0].mxu0
    %770 = vmatprep.mubr.bf16.mxu0 0
    %771 = vmatmul.mubr.bf16.gmra.mrb[0].mxu0 %v624
    %v772 = vpop.f32.mrb[0].mxu0
    %v773 = vadd.f32 %v648, %v772
    %v774 = vpop.f32.mrb[0].mxu0
    %v775 = vpop.f32.mrb[0].mxu0
    %v776 = vadd.f32 %v648, %v775
    %v777 = vpop.f32.mrb[0].mxu0
    %778 = vmatprep.mubr.bf16.mxu0 0
    %779 = vmatmul.mubr.bf16.gmra.mrb[0].mxu0 %v625
    %v780 = vpop.f32.mrb[0].mxu0
    %v781 = vadd.f32 %v648, %v780
    %v782 = vpop.f32.mrb[0].mxu0
    %v783 = vpop.f32.mrb[0].mxu0
    %v784 = vadd.f32 %v648, %v783
    %v785 = vpop.f32.mrb[0].mxu0
    %786 = vmatprep.mubr.bf16.mxu0 0
    %787 = vmatmul.mubr.bf16.gmra.mrb[0].mxu0 %v626
    %v788 = vpop.f32.mrb[0].mxu0
    %v789 = vadd.f32 %v648, %v788
    %v790 = vpop.f32.mrb[0].mxu0
    %v791 = vpop.f32.mrb[0].mxu0
    %v792 = vadd.f32 %v648, %v791
    %v793 = vpop.f32.mrb[0].mxu0
    %794 = vdwg.mxu0
    %795 = vst [vmem:[#allocation12] sm:$0xff] %v733
    %796 = vst [vmem:[#allocation12 + $0x8] sm:$0xff] %v736
    %797 = vst [vmem:[#allocation12 + $0x10] sm:$0xff] %v741
    %798 = vst [vmem:[#allocation12 + $0x18] sm:$0xff] %v744
    %799 = vst [vmem:[#allocation12 + $0x20] sm:$0xff] %v749
    %800 = vst [vmem:[#allocation12 + $0x28] sm:$0xff] %v752
    %801 = vst [vmem:[#allocation12 + $0x30] sm:$0xff] %v757
    %802 = vst [vmem:[#allocation12 + $0x38] sm:$0xff] %v760
    %803 = vst [vmem:[#allocation12 + $0x40] sm:$0xff] %v765
    %804 = vst [vmem:[#allocation12 + $0x48] sm:$0xff] %v768
    %805 = vst [vmem:[#allocation12 + $0x50] sm:$0xff] %v773
    %806 = vst [vmem:[#allocation12 + $0x58] sm:$0xff] %v776
    %807 = vst [vmem:[#allocation12 + $0x60] sm:$0xff] %v781
    %808 = vst [vmem:[#allocation12 + $0x68] sm:$0xff] %v784
    %809 = vst [vmem:[#allocation12 + $0x70] sm:$0xff] %v789
    %810 = vst [vmem:[#allocation12 + $0x78] sm:$0xff] %v792
    // Predicated region
    $region46: #{tpu_custom_call.1} parent=1 // pred_check
      _
    $region47: #{tpu_custom_call.1} parent=1 // pred_check_branch
      %812 = sbr.rel (0) target = $region49
    $region48: #{tpu_custom_call.1} parent=1 // pred_region
      %s814 = ssub.s32 2048, 2048
      %815 = vsyncadd [#allocation6], %s814
      %s816 = sshll.u32 [#allocation12], 4
      %s817 = int_to_ptr.vmem [resolvable:$true] %s816
      %822 = dma.vmem_to_hbm [thread:$0]  %s817, 2048, %s7, [#allocation6], 128, 128, 8
    $region49: #{tpu_custom_call.1} parent=1 // pred_fallthru
      _
    // Predicated region
    $region50: #{tpu_custom_call.1} parent=1 // pred_check
      _
    $region51: #{tpu_custom_call.1} parent=1 // pred_check_branch
      %824 = sbr.rel (0) target = $region53
    $region52: #{tpu_custom_call.1} parent=1 // pred_region
      %825 = dma.done [#allocation6], 2048
    $region53: #{tpu_custom_call.1} parent=1 // pred_fallthru
      _
    %826 = vsyncpa [#allocation5], 1
    %827 = vsyncpa [#allocation8], 1
    %828 = vsyncpa [#allocation11], 1
    %829 = vsyncpa [#allocation6], 1

// kernel: tpu_custom_call.1
$region0: #{tpu_custom_call.1}
  #allocation0 [shape = 'u32[]', space=smem, size = 0x4, offset = 0x4, fixed_abs, tag = 'smem constant byte address 0x4 - core index']
  #allocation1 [shape = 'u32[144,128]{1,0:T(1,128)}', space=vmem, size = 0x12000, scoped, tag = 'internal scratch']
  #allocation2 [shape = 'f32[128,128]{1,0:T(8,128)}', space=vmem, size = 0x10000, scoped, tag = 'scratch operand']
  %s0 = inlined_call_operand.hbm [shape: bf16[128,128], index: 0, kind: input, shape index: {}]
  %s1 = inlined_call_operand.hbm [shape: bf16[128,128], index: 1, kind: input, shape index: {}]
  %s2 = inlined_call_operand.vmem [shape: f32[1,128], index: 2, kind: input, shape index: {}]
  %s3 = inlined_call_operand.hbm [shape: bf16[128,128], index: 3, kind: output, shape index: {}]
  %s4 = sld [smem:[#allocation0]]
  $region38: #{tpu_custom_call.1} parent=0
    _
  %s6 = ssub.s32 1, %s4
  %s7 = scalar_select 0, %s6, %s4
  $region1: #{tpu_custom_call.1} parent=0
    #allocation3 [shape = 'u8[32768]{0}', space=vmem, size = 0x8000, scoped, tag = 'input window, operand 0, single buffered']
    #allocation4 [shape = 's32[1]{0}', space=sflag, size = 0x4, scoped, tag = 'scoped memory for tpu_custom_call.1']
    #allocation5 [shape = 's32[1]{0}', space=sflag, size = 0x4, scoped, tag = 'scoped memory for tpu_custom_call.1']
    #allocation6 [shape = 'u8[32768]{0}', space=vmem, size = 0x8000, scoped, tag = 'input window, operand 1, single buffered']
    #allocation7 [shape = 's32[1]{0}', space=sflag, size = 0x4, scoped, tag = 'scoped memory for tpu_custom_call.1']
    #allocation8 [shape = 'u8[32768]{0}', space=vmem, size = 0x8000, scoped, tag = 'output window, operand 0, single buffered']
    %8 = vsyncpa [#allocation4], 0
    %9 = vsyncpa [#allocation7], 0
    %10 = vsyncpa [#allocation5], 0
    // Predicated region
    $region2: #{tpu_custom_call.1} parent=1 // pred_check
      _
    $region3: #{tpu_custom_call.1} parent=1 // pred_check_branch
      %12 = sbr.rel (0) target = $region5
    $region4: #{tpu_custom_call.1} parent=1 // pred_region
      %s14 = ssub.s32 1024, 1024
      %15 = vsyncadd [#allocation4], %s14
      %s16 = sshll.u32 [#allocation3], 4
      %s17 = int_to_ptr.vmem [resolvable:$true] %s16
      %22 = dma.hbm_to_vmem [thread:$0]  %s0, 1024, %s17, [#allocation4], 64, 64, 4
    $region5: #{tpu_custom_call.1} parent=1 // pred_fallthru
      _
    // Predicated region
    $region6: #{tpu_custom_call.1} parent=1 // pred_check
      _
    $region7: #{tpu_custom_call.1} parent=1 // pred_check_branch
      %24 = sbr.rel (0) target = $region9
    $region8: #{tpu_custom_call.1} parent=1 // pred_region
      %s26 = ssub.s32 1024, 1024
      %27 = vsyncadd [#allocation7], %s26
      %s28 = sshll.u32 [#allocation6], 4
      %s29 = int_to_ptr.vmem [resolvable:$true] %s28
      %34 = dma.hbm_to_vmem [thread:$0]  %s1, 1024, %s29, [#allocation7], 64, 64, 4
    $region9: #{tpu_custom_call.1} parent=1 // pred_fallthru
      _
    // Predicated region
    $region10: #{tpu_custom_call.1} parent=1 // pred_check
      _
    $region11: #{tpu_custom_call.1} parent=1 // pred_check_branch
      %36 = sbr.rel (0) target = $region13
    $region12: #{tpu_custom_call.1} parent=1 // pred_region
      _
    $region13: #{tpu_custom_call.1} parent=1 // pred_fallthru
      _
    // Predicated region
    $region14: #{tpu_custom_call.1} parent=1 // pred_check
      _
    $region15: #{tpu_custom_call.1} parent=1 // pred_check_branch
      %38 = sbr.rel (0) target = $region17
    $region16: #{tpu_custom_call.1} parent=1 // pred_region
      %39 = dma.done [#allocation4], 1024
    $region17: #{tpu_custom_call.1} parent=1 // pred_fallthru
      _
    // Predicated region
    $region18: #{tpu_custom_call.1} parent=1 // pred_check
      _
    $region19: #{tpu_custom_call.1} parent=1 // pred_check_branch
      %41 = sbr.rel (0) target = $region21
    $region20: #{tpu_custom_call.1} parent=1 // pred_region
      %42 = dma.done [#allocation7], 1024
    $region21: #{tpu_custom_call.1} parent=1 // pred_fallthru
      _
    %p44 = scmp.eq.s32.totalorder 0, 0
    // Predicated region
    $region22: #{tpu_custom_call.1} parent=1 // pred_check
      %p45 = pneg %p44
    $region23: #{tpu_custom_call.1} parent=1 // pred_check_branch
      %47 = sbr.rel (%p45) target = $region25
    $region24: #{tpu_custom_call.1} parent=1 // pred_region
      %48 = vst [vmem:[#allocation2] sm:$0xff] 0.0
      %49 = vst [vmem:[#allocation2 + $0x8] sm:$0xff] 0.0
      %50 = vst [vmem:[#allocation2 + $0x10] sm:$0xff] 0.0
      %51 = vst [vmem:[#allocation2 + $0x18] sm:$0xff] 0.0
      %52 = vst [vmem:[#allocation2 + $0x20] sm:$0xff] 0.0
      %53 = vst [vmem:[#allocation2 + $0x28] sm:$0xff] 0.0
      %54 = vst [vmem:[#allocation2 + $0x30] sm:$0xff] 0.0
      %55 = vst [vmem:[#allocation2 + $0x38] sm:$0xff] 0.0
      %56 = vst [vmem:[#allocation2 + $0x40] sm:$0xff] 0.0
      %57 = vst [vmem:[#allocation2 + $0x48] sm:$0xff] 0.0
      %58 = vst [vmem:[#allocation2 + $0x50] sm:$0xff] 0.0
      %59 = vst [vmem:[#allocation2 + $0x58] sm:$0xff] 0.0
      %60 = vst [vmem:[#allocation2 + $0x60] sm:$0xff] 0.0
      %61 = vst [vmem:[#allocation2 + $0x68] sm:$0xff] 0.0
      %62 = vst [vmem:[#allocation2 + $0x70] sm:$0xff] 0.0
      %63 = vst [vmem:[#allocation2 + $0x78] sm:$0xff] 0.0
    $region25: #{tpu_custom_call.1} parent=1 // pred_fallthru
      _
    %v64 = vld [vmem:[#allocation2] sm:$0xff]
    %v65 = vld [vmem:[#allocation2 + $0x8] sm:$0xff]
    %v66 = vld [vmem:[#allocation2 + $0x10] sm:$0xff]
    %v67 = vld [vmem:[#allocation2 + $0x18] sm:$0xff]
    %v68 = vld [vmem:[#allocation2 + $0x20] sm:$0xff]
    %v69 = vld [vmem:[#allocation2 + $0x28] sm:$0xff]
    %v70 = vld [vmem:[#allocation2 + $0x30] sm:$0xff]
    %v71 = vld [vmem:[#allocation2 + $0x38] sm:$0xff]
    %v72 = vld [vmem:[#allocation2 + $0x40] sm:$0xff]
    %v73 = vld [vmem:[#allocation2 + $0x48] sm:$0xff]
    %v74 = vld [vmem:[#allocation2 + $0x50] sm:$0xff]
    %v75 = vld [vmem:[#allocation2 + $0x58] sm:$0xff]
    %v76 = vld [vmem:[#allocation2 + $0x60] sm:$0xff]
    %v77 = vld [vmem:[#allocation2 + $0x68] sm:$0xff]
    %v78 = vld [vmem:[#allocation2 + $0x70] sm:$0xff]
    %v79 = vld [vmem:[#allocation2 + $0x78] sm:$0xff]
    %v80 = vld [vmem:[#allocation3] sm:$0xf]
    %v81 = vld [vmem:[#allocation3 + $0x4] sm:$0xf]
    %v82 = vld [vmem:[#allocation3 + $0x8] sm:$0xf]
    %v83 = vld [vmem:[#allocation3 + $0xc] sm:$0xf]
    %v84 = vld [vmem:[#allocation3 + $0x10] sm:$0xf]
    %v85 = vld [vmem:[#allocation3 + $0x14] sm:$0xf]
    %v86 = vld [vmem:[#allocation3 + $0x18] sm:$0xf]
    %v87 = vld [vmem:[#allocation3 + $0x1c] sm:$0xf]
    %v88 = vld [vmem:[#allocation3 + $0x20] sm:$0xf]
    %v89 = vld [vmem:[#allocation3 + $0x24] sm:$0xf]
    %v90 = vld [vmem:[#allocation3 + $0x28] sm:$0xf]
    %v91 = vld [vmem:[#allocation3 + $0x2c] sm:$0xf]
    %v92 = vld [vmem:[#allocation3 + $0x30] sm:$0xf]
    %v93 = vld [vmem:[#allocation3 + $0x34] sm:$0xf]
    %v94 = vld [vmem:[#allocation3 + $0x38] sm:$0xf]
    %v95 = vld [vmem:[#allocation3 + $0x3c] sm:$0xf]
    %v96 = vld [vmem:[#allocation6] sm:$0xf]
    %v97 = vld [vmem:[#allocation6 + $0x4] sm:$0xf]
    %v98 = vld [vmem:[#allocation6 + $0x8] sm:$0xf]
    %v99 = vld [vmem:[#allocation6 + $0xc] sm:$0xf]
    %v100 = vld [vmem:[#allocation6 + $0x10] sm:$0xf]
    %v101 = vld [vmem:[#allocation6 + $0x14] sm:$0xf]
    %v102 = vld [vmem:[#allocation6 + $0x18] sm:$0xf]
    %v103 = vld [vmem:[#allocation6 + $0x1c] sm:$0xf]
    %v104 = vld [vmem:[#allocation6 + $0x20] sm:$0xf]
    %v105 = vld [vmem:[#allocation6 + $0x24] sm:$0xf]
    %v106 = vld [vmem:[#allocation6 + $0x28] sm:$0xf]
    %v107 = vld [vmem:[#allocation6 + $0x2c] sm:$0xf]
    %v108 = vld [vmem:[#allocation6 + $0x30] sm:$0xf]
    %v109 = vld [vmem:[#allocation6 + $0x34] sm:$0xf]
    %v110 = vld [vmem:[#allocation6 + $0x38] sm:$0xf]
    %v111 = vld [vmem:[#allocation6 + $0x3c] sm:$0xf]
    %v128 = vunpack.c.l.b16 %v80
    %v129 = vunpack.c.l.b16 %v81
    %v130 = vunpack.c.l.b16 %v82
    %v131 = vunpack.c.l.b16 %v83
    %v132 = vunpack.c.l.b16 %v84
    %v133 = vunpack.c.l.b16 %v85
    %v134 = vunpack.c.l.b16 %v86
    %v135 = vunpack.c.l.b16 %v87
    %v136 = vunpack.c.l.b16 %v88
    %v137 = vunpack.c.l.b16 %v89
    %v138 = vunpack.c.l.b16 %v90
    %v139 = vunpack.c.l.b16 %v91
    %v140 = vunpack.c.l.b16 %v92
    %v141 = vunpack.c.l.b16 %v93
    %v142 = vunpack.c.l.b16 %v94
    %v143 = vunpack.c.l.b16 %v95
    %v144 = vpack.c.b16 %v129, %v128
    %v145 = vpack.c.b16 %v131, %v130
    %v146 = vpack.c.b16 %v133, %v132
    %v147 = vpack.c.b16 %v135, %v134
    %v148 = vpack.c.b16 %v137, %v136
    %v149 = vpack.c.b16 %v139, %v138
    %v150 = vpack.c.b16 %v141, %v140
    %v151 = vpack.c.b16 %v143, %v142
    %v176 = vunpack.c.l.b16 %v96
    %v177 = vunpack.c.l.b16 %v97
    %v178 = vunpack.c.l.b16 %v98
    %v179 = vunpack.c.l.b16 %v99
    %v180 = vunpack.c.l.b16 %v100
    %v181 = vunpack.c.l.b16 %v101
    %v182 = vunpack.c.l.b16 %v102
    %v183 = vunpack.c.l.b16 %v103
    %v184 = vunpack.c.l.b16 %v104
    %v185 = vunpack.c.l.b16 %v105
    %v186 = vunpack.c.l.b16 %v106
    %v187 = vunpack.c.l.b16 %v107
    %v188 = vunpack.c.l.b16 %v108
    %v189 = vunpack.c.l.b16 %v109
    %v190 = vunpack.c.l.b16 %v110
    %v191 = vunpack.c.l.b16 %v111
    %v192 = vpack.c.b16 %v177, %v176
    %v193 = vpack.c.b16 %v179, %v178
    %v194 = vpack.c.b16 %v181, %v180
    %v195 = vpack.c.b16 %v183, %v182
    %v196 = vpack.c.b16 %v185, %v184
    %v197 = vpack.c.b16 %v187, %v186
    %v198 = vpack.c.b16 %v189, %v188
    %v199 = vpack.c.b16 %v191, %v190
    %208 = vmatprep.subr.bf16.mxu0 0
    %209 = vmatpush1.bf16.msra.mxu0 %v192
    %210 = vmatprep.subr.bf16.mxu0 0
    %211 = vmatpush1.bf16.msra.mxu0 %v193
    %212 = vmatprep.subr.bf16.mxu0 0
    %213 = vmatpush1.bf16.msra.mxu0 %v194
    %214 = vmatprep.subr.bf16.mxu0 0
    %215 = vmatpush1.bf16.msra.mxu0 %v195
    %216 = vmatprep.subr.bf16.mxu0 0
    %217 = vmatpush1.bf16.msra.mxu0 %v196
    %218 = vmatprep.subr.bf16.mxu0 0
    %219 = vmatpush1.bf16.msra.mxu0 %v197
    %220 = vmatprep.subr.bf16.mxu0 0
    %221 = vmatpush1.bf16.msra.mxu0 %v198
    %222 = vmatprep.subr.bf16.mxu0 0
    %223 = vmatpush1.bf16.msra.mxu0 %v199
    %224 = vmatprep.subr.bf16.mxu0 0
    %225 = vmatpush1.bf16.msra.mxu0 0
    %226 = vmatprep.subr.bf16.mxu0 0
    %227 = vmatpush1.bf16.msra.mxu0 0
    %228 = vmatprep.subr.bf16.mxu0 0
    %229 = vmatpush1.bf16.msra.mxu0 0
    %230 = vmatprep.subr.bf16.mxu0 0
    %231 = vmatpush1.bf16.msra.mxu0 0
    %232 = vmatprep.subr.bf16.mxu0 0
    %233 = vmatpush1.bf16.msra.mxu0 0
    %234 = vmatprep.subr.bf16.mxu0 0
    %235 = vmatpush1.bf16.msra.mxu0 0
    %236 = vmatprep.subr.bf16.mxu0 0
    %237 = vmatpush1.bf16.msra.mxu0 0
    %238 = vmatprep.subr.bf16.mxu0 0
    %239 = vmatpush1.bf16.msra.mxu0 0
    %240 = vmatprep.mubr.bf16.mxu0 0
    %241 = vmatmul.mubr.bf16.gmra.mrb[0].mxu0 %v144
    %v242 = vpop.f32.mrb[0].mxu0
    %v243 = vadd.f32 0.0, %v242
    %v244 = vpop.f32.mrb[0].mxu0
    %v245 = vpop.f32.mrb[0].mxu0
    %v246 = vadd.f32 0.0, %v245
    %v247 = vpop.f32.mrb[0].mxu0
    %248 = vmatprep.mubr.bf16.mxu0 0
    %249 = vmatmul.mubr.bf16.gmra.mrb[0].mxu0 %v145
    %v250 = vpop.f32.mrb[0].mxu0
    %v251 = vadd.f32 0.0, %v250
    %v252 = vpop.f32.mrb[0].mxu0
    %v253 = vpop.f32.mrb[0].mxu0
    %v254 = vadd.f32 0.0, %v253
    %v255 = vpop.f32.mrb[0].mxu0
    %256 = vmatprep.mubr.bf16.mxu0 0
    %257 = vmatmul.mubr.bf16.gmra.mrb[0].mxu0 %v146
    %v258 = vpop.f32.mrb[0].mxu0
    %v259 = vadd.f32 0.0, %v258
    %v260 = vpop.f32.mrb[0].mxu0
    %v261 = vpop.f32.mrb[0].mxu0
    %v262 = vadd.f32 0.0, %v261
    %v263 = vpop.f32.mrb[0].mxu0
    %264 = vmatprep.mubr.bf16.mxu0 0
    %265 = vmatmul.mubr.bf16.gmra.mrb[0].mxu0 %v147
    %v266 = vpop.f32.mrb[0].mxu0
    %v267 = vadd.f32 0.0, %v266
    %v268 = vpop.f32.mrb[0].mxu0
    %v269 = vpop.f32.mrb[0].mxu0
    %v270 = vadd.f32 0.0, %v269
    %v271 = vpop.f32.mrb[0].mxu0
    %272 = vmatprep.mubr.bf16.mxu0 0
    %273 = vmatmul.mubr.bf16.gmra.mrb[0].mxu0 %v148
    %v274 = vpop.f32.mrb[0].mxu0
    %v275 = vadd.f32 0.0, %v274
    %v276 = vpop.f32.mrb[0].mxu0
    %v277 = vpop.f32.mrb[0].mxu0
    %v278 = vadd.f32 0.0, %v277
    %v279 = vpop.f32.mrb[0].mxu0
    %280 = vmatprep.mubr.bf16.mxu0 0
    %281 = vmatmul.mubr.bf16.gmra.mrb[0].mxu0 %v149
    %v282 = vpop.f32.mrb[0].mxu0
    %v283 = vadd.f32 0.0, %v282
    %v284 = vpop.f32.mrb[0].mxu0
    %v285 = vpop.f32.mrb[0].mxu0
    %v286 = vadd.f32 0.0, %v285
    %v287 = vpop.f32.mrb[0].mxu0
    %288 = vmatprep.mubr.bf16.mxu0 0
    %289 = vmatmul.mubr.bf16.gmra.mrb[0].mxu0 %v150
    %v290 = vpop.f32.mrb[0].mxu0
    %v291 = vadd.f32 0.0, %v290
    %v292 = vpop.f32.mrb[0].mxu0
    %v293 = vpop.f32.mrb[0].mxu0
    %v294 = vadd.f32 0.0, %v293
    %v295 = vpop.f32.mrb[0].mxu0
    %296 = vmatprep.mubr.bf16.mxu0 0
    %297 = vmatmul.mubr.bf16.gmra.mrb[0].mxu0 %v151
    %v298 = vpop.f32.mrb[0].mxu0
    %v299 = vadd.f32 0.0, %v298
    %v300 = vpop.f32.mrb[0].mxu0
    %v301 = vpop.f32.mrb[0].mxu0
    %v302 = vadd.f32 0.0, %v301
    %v303 = vpop.f32.mrb[0].mxu0
    %304 = vdwg.mxu0
    %v305 = vadd.f32 %v64, %v243
    %v306 = vadd.f32 %v65, %v246
    %v307 = vadd.f32 %v66, %v251
    %v308 = vadd.f32 %v67, %v254
    %v309 = vadd.f32 %v68, %v259
    %v310 = vadd.f32 %v69, %v262
    %v311 = vadd.f32 %v70, %v267
    %v312 = vadd.f32 %v71, %v270
    %v313 = vadd.f32 %v72, %v275
    %v314 = vadd.f32 %v73, %v278
    %v315 = vadd.f32 %v74, %v283
    %v316 = vadd.f32 %v75, %v286
    %v317 = vadd.f32 %v76, %v291
    %v318 = vadd.f32 %v77, %v294
    %v319 = vadd.f32 %v78, %v299
    %v320 = vadd.f32 %v79, %v302
    %321 = vst [vmem:[#allocation2] sm:$0xff] %v305
    %322 = vst [vmem:[#allocation2 + $0x8] sm:$0xff] %v306
    %323 = vst [vmem:[#allocation2 + $0x10] sm:$0xff] %v307
    %324 = vst [vmem:[#allocation2 + $0x18] sm:$0xff] %v308
    %325 = vst [vmem:[#allocation2 + $0x20] sm:$0xff] %v309
    %326 = vst [vmem:[#allocation2 + $0x28] sm:$0xff] %v310
    %327 = vst [vmem:[#allocation2 + $0x30] sm:$0xff] %v311
    %328 = vst [vmem:[#allocation2 + $0x38] sm:$0xff] %v312
    %329 = vst [vmem:[#allocation2 + $0x40] sm:$0xff] %v313
    %330 = vst [vmem:[#allocation2 + $0x48] sm:$0xff] %v314
    %331 = vst [vmem:[#allocation2 + $0x50] sm:$0xff] %v315
    %332 = vst [vmem:[#allocation2 + $0x58] sm:$0xff] %v316
    %333 = vst [vmem:[#allocation2 + $0x60] sm:$0xff] %v317
    %334 = vst [vmem:[#allocation2 + $0x68] sm:$0xff] %v318
    %335 = vst [vmem:[#allocation2 + $0x70] sm:$0xff] %v319
    %336 = vst [vmem:[#allocation2 + $0x78] sm:$0xff] %v320
    // Predicated region
    $region26: #{tpu_custom_call.1} parent=1 // pred_check
      %p337 = pneg %p44
    $region27: #{tpu_custom_call.1} parent=1 // pred_check_branch
      %339 = sbr.rel (%p337) target = $region29
    $region28: #{tpu_custom_call.1} parent=1 // pred_region
      %v340 = vld [vmem:[#allocation2] sm:$0xff]
      %v341 = vld [vmem:[#allocation2 + $0x8] sm:$0xff]
      %v342 = vld [vmem:[#allocation2 + $0x10] sm:$0xff]
      %v343 = vld [vmem:[#allocation2 + $0x18] sm:$0xff]
      %v344 = vld [vmem:[#allocation2 + $0x20] sm:$0xff]
      %v345 = vld [vmem:[#allocation2 + $0x28] sm:$0xff]
      %v346 = vld [vmem:[#allocation2 + $0x30] sm:$0xff]
      %v347 = vld [vmem:[#allocation2 + $0x38] sm:$0xff]
      %v348 = vld [vmem:[#allocation2 + $0x40] sm:$0xff]
      %v349 = vld [vmem:[#allocation2 + $0x48] sm:$0xff]
      %v350 = vld [vmem:[#allocation2 + $0x50] sm:$0xff]
      %v351 = vld [vmem:[#allocation2 + $0x58] sm:$0xff]
      %v352 = vld [vmem:[#allocation2 + $0x60] sm:$0xff]
      %v353 = vld [vmem:[#allocation2 + $0x68] sm:$0xff]
      %v354 = vld [vmem:[#allocation2 + $0x70] sm:$0xff]
      %v355 = vld [vmem:[#allocation2 + $0x78] sm:$0xff]
      %v356 = vld [vmem:[%s2] sm:$0x1]
      %v358 = vlaneseq
      %v359 = vshrl.u32 %v358, 7
      %v360 = vsub.s32 0, %v359
      %v361 = vrot.slane %v356, %v360
      %v363 = vadd.f32 %v340, %v361
      %v364 = vadd.f32 %v341, %v361
      %v365 = vadd.f32 %v342, %v361
      %v366 = vadd.f32 %v343, %v361
      %v367 = vadd.f32 %v344, %v361
      %v368 = vadd.f32 %v345, %v361
      %v369 = vadd.f32 %v346, %v361
      %v370 = vadd.f32 %v347, %v361
      %v371 = vadd.f32 %v348, %v361
      %v372 = vadd.f32 %v349, %v361
      %v373 = vadd.f32 %v350, %v361
      %v374 = vadd.f32 %v351, %v361
      %v375 = vadd.f32 %v352, %v361
      %v376 = vadd.f32 %v353, %v361
      %v377 = vadd.f32 %v354, %v361
      %v378 = vadd.f32 %v355, %v361
      %vm379 = vcmp.ge.f32.partialorder %v363, 0.0
      %vm380 = vcmp.ge.f32.partialorder %v364, 0.0
      %vm381 = vcmp.ge.f32.partialorder %v365, 0.0
      %vm382 = vcmp.ge.f32.partialorder %v366, 0.0
      %vm383 = vcmp.ge.f32.partialorder %v367, 0.0
      %vm384 = vcmp.ge.f32.partialorder %v368, 0.0
      %vm385 = vcmp.ge.f32.partialorder %v369, 0.0
      %vm386 = vcmp.ge.f32.partialorder %v370, 0.0
      %vm387 = vcmp.ge.f32.partialorder %v371, 0.0
      %vm388 = vcmp.ge.f32.partialorder %v372, 0.0
      %vm389 = vcmp.ge.f32.partialorder %v373, 0.0
      %vm390 = vcmp.ge.f32.partialorder %v374, 0.0
      %vm391 = vcmp.ge.f32.partialorder %v375, 0.0
      %vm392 = vcmp.ge.f32.partialorder %v376, 0.0
      %vm393 = vcmp.ge.f32.partialorder %v377, 0.0
      %vm394 = vcmp.ge.f32.partialorder %v378, 0.0
      %v395 = vmul.f32 %v363, 0.2
      %v396 = vmul.f32 %v364, 0.2
      %v397 = vmul.f32 %v365, 0.2
      %v398 = vmul.f32 %v366, 0.2
      %v399 = vmul.f32 %v367, 0.2
      %v400 = vmul.f32 %v368, 0.2
      %v401 = vmul.f32 %v369, 0.2
      %v402 = vmul.f32 %v370, 0.2
      %v403 = vmul.f32 %v371, 0.2
      %v404 = vmul.f32 %v372, 0.2
      %v405 = vmul.f32 %v373, 0.2
      %v406 = vmul.f32 %v374, 0.2
      %v407 = vmul.f32 %v375, 0.2
      %v408 = vmul.f32 %v376, 0.2
      %v409 = vmul.f32 %v377, 0.2
      %v410 = vmul.f32 %v378, 0.2
      %v411 = vsel %vm379, %v363, %v395
      %v412 = vsel %vm380, %v364, %v396
      %v413 = vsel %vm381, %v365, %v397
      %v414 = vsel %vm382, %v366, %v398
      %v415 = vsel %vm383, %v367, %v399
      %v416 = vsel %vm384, %v368, %v400
      %v417 = vsel %vm385, %v369, %v401
      %v418 = vsel %vm386, %v370, %v402
      %v419 = vsel %vm387, %v371, %v403
      %v420 = vsel %vm388, %v372, %v404
      %v421 = vsel %vm389, %v373, %v405
      %v422 = vsel %vm390, %v374, %v406
      %v423 = vsel %vm391, %v375, %v407
      %v424 = vsel %vm392, %v376, %v408
      %v425 = vsel %vm393, %v377, %v409
      %v426 = vsel %vm394, %v378, %v410
      %v427 = vpack.c.bf16 %v412, %v411
      %v428 = vpack.c.bf16 %v414, %v413
      %v429 = vpack.c.bf16 %v416, %v415
      %v430 = vpack.c.bf16 %v418, %v417
      %v431 = vpack.c.bf16 %v420, %v419
      %v432 = vpack.c.bf16 %v422, %v421
      %v433 = vpack.c.bf16 %v424, %v423
      %v434 = vpack.c.bf16 %v426, %v425
      %v443 = vunpack.c.l.b16 %v427
      %v444 = vunpack.c.h.b16 %v427
      %v445 = vunpack.c.l.b16 %v428
      %v446 = vunpack.c.h.b16 %v428
      %v447 = vunpack.c.l.b16 %v429
      %v448 = vunpack.c.h.b16 %v429
      %v449 = vunpack.c.l.b16 %v430
      %v450 = vunpack.c.h.b16 %v430
      %v451 = vunpack.c.l.b16 %v431
      %v452 = vunpack.c.h.b16 %v431
      %v453 = vunpack.c.l.b16 %v432
      %v454 = vunpack.c.h.b16 %v432
      %v455 = vunpack.c.l.b16 %v433
      %v456 = vunpack.c.h.b16 %v433
      %v457 = vunpack.c.l.b16 %v434
      %v458 = vunpack.c.h.b16 %v434
      %v459 = vpack.c.b16 %v443, %v443
      %v460 = vpack.c.b16 %v444, %v444
      %v461 = vpack.c.b16 %v445, %v445
      %v462 = vpack.c.b16 %v446, %v446
      %v463 = vpack.c.b16 %v447, %v447
      %v464 = vpack.c.b16 %v448, %v448
      %v465 = vpack.c.b16 %v449, %v449
      %v466 = vpack.c.b16 %v450, %v450
      %v467 = vpack.c.b16 %v451, %v451
      %v468 = vpack.c.b16 %v452, %v452
      %v469 = vpack.c.b16 %v453, %v453
      %v470 = vpack.c.b16 %v454, %v454
      %v471 = vpack.c.b16 %v455, %v455
      %v472 = vpack.c.b16 %v456, %v456
      %v473 = vpack.c.b16 %v457, %v457
      %v474 = vpack.c.b16 %v458, %v458
      %491 = vst [vmem:[#allocation8] sm:$0xf] %v459
      %492 = vst [vmem:[#allocation8 + $0x4] sm:$0xf] %v460
      %493 = vst [vmem:[#allocation8 + $0x8] sm:$0xf] %v461
      %494 = vst [vmem:[#allocation8 + $0xc] sm:$0xf] %v462
      %495 = vst [vmem:[#allocation8 + $0x10] sm:$0xf] %v463
      %496 = vst [vmem:[#allocation8 + $0x14] sm:$0xf] %v464
      %497 = vst [vmem:[#allocation8 + $0x18] sm:$0xf] %v465
      %498 = vst [vmem:[#allocation8 + $0x1c] sm:$0xf] %v466
      %499 = vst [vmem:[#allocation8 + $0x20] sm:$0xf] %v467
      %500 = vst [vmem:[#allocation8 + $0x24] sm:$0xf] %v468
      %501 = vst [vmem:[#allocation8 + $0x28] sm:$0xf] %v469
      %502 = vst [vmem:[#allocation8 + $0x2c] sm:$0xf] %v470
      %503 = vst [vmem:[#allocation8 + $0x30] sm:$0xf] %v471
      %504 = vst [vmem:[#allocation8 + $0x34] sm:$0xf] %v472
      %505 = vst [vmem:[#allocation8 + $0x38] sm:$0xf] %v473
      %506 = vst [vmem:[#allocation8 + $0x3c] sm:$0xf] %v474
    $region29: #{tpu_custom_call.1} parent=1 // pred_fallthru
      _
    // Predicated region
    $region30: #{tpu_custom_call.1} parent=1 // pred_check
      _
    $region31: #{tpu_custom_call.1} parent=1 // pred_check_branch
      %508 = sbr.rel (0) target = $region33
    $region32: #{tpu_custom_call.1} parent=1 // pred_region
      %s510 = ssub.s32 1024, 1024
      %511 = vsyncadd [#allocation5], %s510
      %s512 = sshll.u32 [#allocation8], 4
      %s513 = int_to_ptr.vmem [resolvable:$true] %s512
      %518 = dma.vmem_to_hbm [thread:$0]  %s513, 1024, %s3, [#allocation5], 64, 64, 4
    $region33: #{tpu_custom_call.1} parent=1 // pred_fallthru
      _
    // Predicated region
    $region34: #{tpu_custom_call.1} parent=1 // pred_check
      _
    $region35: #{tpu_custom_call.1} parent=1 // pred_check_branch
      %520 = sbr.rel (0) target = $region37
    $region36: #{tpu_custom_call.1} parent=1 // pred_region
      %521 = dma.done [#allocation5], 1024
    $region37: #{tpu_custom_call.1} parent=1 // pred_fallthru
      _
    %522 = vsyncpa [#allocation4], 1
    %523 = vsyncpa [#allocation7], 1
    %524 = vsyncpa [#allocation5], 1

</llo_original>
